<compile_context>
chip_gen: v7x
topology: tpu7x:2x2x1
jax: 0.10.0
libtpu: 0.0.40
codegen_flags: <defaults>
</compile_context>

<pallas_src>
import math
import functools

import jax
import jax.numpy as jnp
from jax import lax
from jax.experimental import pallas as pl
from jax.experimental.pallas import tpu as pltpu

_NEG_INF = -1e30   # large finite negative: exp() underflows to exactly 0.0


def _layer_norm(x, w, b, eps=1e-5):
    mu = jnp.mean(x, axis=-1, keepdims=True)
    var = jnp.mean((x - mu) ** 2, axis=-1, keepdims=True)
    return (x - mu) * lax.rsqrt(var + eps) * w + b


def _gelu_tanh(x):
    c = math.sqrt(2.0 / math.pi)
    return 0.5 * x * (1.0 + jnp.tanh(c * (x + 0.044715 * x * x * x)))


# --------------------- kernel 1: LN1 + Q/K/V projection ----------------------
def _qkv_proj_kernel(matmul_dtype,
                     x_ref, ln_w_ref, ln_b_ref,
                     wq_ref, wk_ref, wv_ref, bq_ref, bk_ref, bv_ref,
                     q_ref, k_ref, v_ref):
    f32 = jnp.float32
    x = x_ref[0].astype(f32)                       # (TR, C)
    h = _layer_norm(x, ln_w_ref[...], ln_b_ref[...])
    if matmul_dtype is not None:
        h = h.astype(matmul_dtype)
    # Three separate lane-dense projections (no fused-qkv lane slicing).
    # W_q / b_q already carry the 1/sqrt(d_head) scale (folded at prep time).
    q = jnp.dot(h, wq_ref[...], preferred_element_type=f32) + bq_ref[...]
    k = jnp.dot(h, wk_ref[...], preferred_element_type=f32) + bk_ref[...]
    v = jnp.dot(h, wv_ref[...], preferred_element_type=f32) + bv_ref[...]
    q_ref[0] = q.astype(q_ref.dtype)
    k_ref[0] = k.astype(k_ref.dtype)
    v_ref[0] = v.astype(v_ref.dtype)


# ---------- kernel 2: causal flash attention + c_proj + residual -------------
def _attn_kernel(n_head, matmul_dtype,
                 x_ref, q_ref, k_ref, v_ref, wproj_ref, bproj_ref,
                 o_ref, m_sc, l_sc, acc_sc, attn_sc):
    f32 = jnp.float32
    _, tq, n_state = q_ref.shape
    tkv = k_ref.shape[1]
    d_head = n_state // n_head

    qi = pl.program_id(1)
    kv = pl.program_id(2)
    q_start = qi * tq
    # Last KV block containing any unmasked (causal) column for this query tile.
    kv_last = (q_start + tq - 1) // tkv

    @pl.when(kv == 0)
    def _init():
        m_sc[...] = jnp.full(m_sc.shape, _NEG_INF, m_sc.dtype)
        l_sc[...] = jnp.zeros(l_sc.shape, l_sc.dtype)
        acc_sc[...] = jnp.zeros(acc_sc.shape, acc_sc.dtype)

    @pl.when(kv <= kv_last)      # causality: skip fully-masked KV blocks entirely
    def _compute():
        q_all = q_ref[0]                            # (tq, C)  bf16/f32, pre-scaled
        k_all = k_ref[0]                            # (tkv, C)
        v_all = v_ref[0]                            # (tkv, C)
        row = lax.broadcasted_iota(jnp.int32, (tq, tkv), 0) + q_start
        col = lax.broadcasted_iota(jnp.int32, (tq, tkv), 1) + kv * tkv
        causal = row >= col
        for hd in range(n_head):
            sl = slice(hd * d_head, (hd + 1) * d_head)
            # q @ k^T via dot_general contracting dims (no materialized transpose)
            s = lax.dot_general(q_all[:, sl], k_all[:, sl],
                                (((1,), (1,)), ((), ())),
                                preferred_element_type=f32)      # (tq, tkv)
            s = jnp.where(causal, s, _NEG_INF)
            m_prev = m_sc[hd]                                    # (tq, 1)
            m_new = jnp.maximum(m_prev, jnp.max(s, axis=-1, keepdims=True))
            alpha = jnp.exp(m_prev - m_new)
            p = jnp.exp(s - m_new)
            l_sc[hd] = alpha * l_sc[hd] + jnp.sum(p, axis=-1, keepdims=True)
            pv = jnp.dot(p.astype(v_all.dtype), v_all[:, sl],
                         preferred_element_type=f32)             # (tq, d_head)
            acc_sc[hd] = alpha * acc_sc[hd] + pv
            m_sc[hd] = m_new

    @pl.when(kv == kv_last)      # finalize: full-width c_proj + residual
    def _finalize():
        approx = matmul_dtype is not None
        for hd in range(n_head):
            sl = slice(hd * d_head, (hd + 1) * d_head)
            inv = pl.reciprocal(l_sc[hd], approx=approx)
            # Static, lane-offset stores into the (TQ, C) scratch: one full-K
            # projection matmul instead of n_head rank-d_head matmuls.
            attn_sc[:, sl] = (acc_sc[hd] * inv).astype(attn_sc.dtype)
        proj = jnp.dot(attn_sc[...], wproj_ref[...],
                       preferred_element_type=f32) + bproj_ref[...]
        o_ref[0] = (x_ref[0].astype(f32) + proj).astype(o_ref.dtype)


# --------------- kernel 3: LN2 + MLP (chunked over n_mlp) + residual ---------
def _mlp_kernel(matmul_dtype,
                x_ref, ln_w_ref, ln_b_ref, wfc_ref, bfc_ref, wp2_ref, bp2_ref,
                o_ref, h2_sc, acc_sc):
    f32 = jnp.float32
    c = pl.program_id(2)

    @pl.when(c == 0)
    def _init():
        x1 = x_ref[0].astype(f32)
        h2 = _layer_norm(x1, ln_w_ref[...], ln_b_ref[...])
        h2_sc[...] = h2.astype(h2_sc.dtype)
        acc_sc[...] = jnp.zeros(acc_sc.shape, acc_sc.dtype)

    fc = jnp.dot(h2_sc[...], wfc_ref[...], preferred_element_type=f32) + bfc_ref[...]
    g = _gelu_tanh(fc)                              # elementwise math stays f32
    if matmul_dtype is not None:
        g = g.astype(matmul_dtype)
    acc_sc[...] += jnp.dot(g, wp2_ref[...], preferred_element_type=f32)

    @pl.when(c == pl.num_programs(2) - 1)
    def _finalize():
        o_ref[0] = (x_ref[0].astype(f32) + acc_sc[...] + bp2_ref[...]).astype(o_ref.dtype)


# ------------------------------- wrapper --------------------------------------
def _pick_tile(n, target=256):
    """Largest multiple-of-8 tile <= target dividing n (sweep up to 512 on v6e)."""
    if n <= target:
        return n
    for t in range(target, 7, -8):
        if n % t == 0:
            return t
    return n


def _pick_chunk(n, target=512):
    """n_mlp chunk: multiple of 128 (keeps MXU contraction deep) dividing n."""
    if n <= target:
        return n
    for c in range(target, 127, -128):
        if n % c == 0:
            return c
    return n


def _vmem_limit(est_bytes):
    """Clamp the scoped-VMEM request to the real per-core budget (v7x: 64 MiB)."""
    cap = 64 * 2**20                        # conservative fallback (safe on v7x)
    try:
        cap = int(pltpu.get_tpu_info().vmem_capacity_bytes)
    except Exception:
        pass
    hi = min((cap * 3) // 4, 100 * 2**20)   # ~48 MiB on v7x, ~96 MiB on v5e/v6e
    return int(min(max(2 * est_bytes, 32 * 2**20), hi))


def _rep_spec(shape, single_buffer):
    """Grid-invariant (replicated) input; optionally single-buffered."""
    nd = len(shape)
    index_map = lambda *args, _nd=nd: (0,) * _nd
    if single_buffer:
        return pl.BlockSpec(shape, index_map, pipeline_mode=pl.Buffered(1))
    return pl.BlockSpec(shape, index_map)


def prepare_params(params, n_head, matmul_dtype=jnp.bfloat16):
    """One-time parameter prep: split the fused c_attn weight, fold the
    1/sqrt(d_head) scale into W_q/b_q, cast big matrices to the MXU dtype."""
    f32 = jnp.float32
    C = params["w_qkv"].shape[0]
    d_head = C // n_head
    scale = 1.0 / math.sqrt(d_head)
    wdt = matmul_dtype if matmul_dtype is not None else params["w_qkv"].dtype
    w_qkv, b_qkv = params["w_qkv"], params["b_qkv"]
    return dict(
        ln1_w=params["ln1_w"].astype(f32), ln1_b=params["ln1_b"].astype(f32),
        ln2_w=params["ln2_w"].astype(f32), ln2_b=params["ln2_b"].astype(f32),
        w_q=(w_qkv[:, 0:C] * scale).astype(wdt),
        w_k=w_qkv[:, C:2 * C].astype(wdt),
        w_v=w_qkv[:, 2 * C:3 * C].astype(wdt),
        b_q=(b_qkv[:, 0:C] * scale).astype(f32),
        b_k=b_qkv[:, C:2 * C].astype(f32),
        b_v=b_qkv[:, 2 * C:3 * C].astype(f32),
        w_proj=params["w_proj"].astype(wdt), b_proj=params["b_proj"].astype(f32),
        w_fc=params["w_fc"].astype(wdt), b_fc=params["b_fc"].astype(f32),
        w_p2=params["w_proj2"].astype(wdt), b_p2=params["b_proj2"].astype(f32),
    )


def _forward(x, prep, n_head, *, tq, tkv, mlp_chunk, matmul_dtype, single_buffer):
    B, T, C = x.shape
    n_mlp = prep["w_fc"].shape[1]
    assert C % n_head == 0
    d_head = C // n_head

    tq = _pick_tile(T) if tq is None else tq
    tkv = tq if tkv is None else tkv
    cm = _pick_chunk(n_mlp) if mlp_chunk is None else mlp_chunk
    assert T % tq == 0 and T % tkv == 0 and n_mlp % cm == 0
    nq, nkv, nc = T // tq, T // tkv, n_mlp // cm
    tr = _pick_tile(T)
    nr = T // tr

    wb = 2 if matmul_dtype is not None else 4
    qb = wb
    xb = jnp.dtype(x.dtype).itemsize
    sbf = 1 if single_buffer else 2
    qkv_dt = matmul_dtype if matmul_dtype is not None else x.dtype
    attn_dt = qkv_dt

    rep = functools.partial(_rep_spec, single_buffer=single_buffer)

    # ---------------- 1) LN1 + Q/K/V projection (once per token) -------------
    k1_est = (2 * tr * C * xb + 2 * 3 * tr * C * qb
              + sbf * 3 * C * C * wb + 8 * tr * C * 4)
    q, k, v = pl.pallas_call(
        functools.partial(_qkv_proj_kernel, matmul_dtype),
        out_shape=(jax.ShapeDtypeStruct((B, T, C), qkv_dt),) * 3,
        grid=(B, nr),
        in_specs=[
            pl.BlockSpec((1, tr, C), lambda b, r: (b, r, 0)),
            rep((1, C)), rep((1, C)),
            rep((C, C)), rep((C, C)), rep((C, C)),
            rep((1, C)), rep((1, C)), rep((1, C)),
        ],
        out_specs=[pl.BlockSpec((1, tr, C), lambda b, r: (b, r, 0))] * 3,
        compiler_params=pltpu.CompilerParams(
            dimension_semantics=("parallel", "parallel"),
            vmem_limit_bytes=_vmem_limit(k1_est)),
    )(x, prep["ln1_w"], prep["ln1_b"],
      prep["w_q"], prep["w_k"], prep["w_v"],
      prep["b_q"], prep["b_k"], prep["b_v"])

    # ---------------- 2) causal attention + c_proj + residual ----------------
    def kv_index(b, qi, kv):
        # Clamp skipped (upper-triangular) KV blocks to the last needed block:
        # identical block index => Pallas skips the DMA for those grid steps.
        last = (qi * tq + tq - 1) // tkv
        return (b, jnp.minimum(kv, last), 0)

    k2_est = (2 * tq * C * (xb + qb) + 2 * 2 * tkv * C * qb
              + sbf * C * C * wb + 2 * tq * C * xb
              + n_head * tq * (2 * 128 + max(d_head, 128)) * 4
              + tq * C * (4 + wb) + 6 * tq * tkv * 4)
    x1 = pl.pallas_call(
        functools.partial(_attn_kernel, n_head, matmul_dtype),
        out_shape=jax.ShapeDtypeStruct((B, T, C), x.dtype),
        grid=(B, nq, nkv),
        in_specs=[
            pl.BlockSpec((1, tq, C), lambda b, i, j: (b, i, 0)),    # x (residual)
            pl.BlockSpec((1, tq, C), lambda b, i, j: (b, i, 0)),    # Q tile
            pl.BlockSpec((1, tkv, C), kv_index),                    # K block
            pl.BlockSpec((1, tkv, C), kv_index),                    # V block
            rep((C, C)), rep((1, C)),                               # attn c_proj
        ],
        out_specs=pl.BlockSpec((1, tq, C), lambda b, i, j: (b, i, 0)),
        scratch_shapes=[
            pltpu.VMEM((n_head, tq, 1), jnp.float32),       # m (online softmax)
            pltpu.VMEM((n_head, tq, 1), jnp.float32),       # l
            pltpu.VMEM((n_head, tq, d_head), jnp.float32),  # per-head acc
            pltpu.VMEM((tq, C), attn_dt),                   # concatenated heads
        ],
        compiler_params=pltpu.CompilerParams(
            dimension_semantics=("parallel", "parallel", "arbitrary"),
            vmem_limit_bytes=_vmem_limit(k2_est)),
    )(x, q, k, v, prep["w_proj"], prep["b_proj"])

    # ---------------- 3) LN2 + MLP (n_mlp-chunked weights) + residual --------
    tm = tr
    k3_est = (4 * tm * C * xb + sbf * 2 * C * cm * wb
              + tm * C * (4 + wb) + 4 * tm * cm * 4)
    out = pl.pallas_call(
        functools.partial(_mlp_kernel, matmul_dtype),
        out_shape=jax.ShapeDtypeStruct((B, T, C), x.dtype),
        grid=(B, T // tm, nc),
        in_specs=[
            pl.BlockSpec((1, tm, C), lambda b, r, c: (b, r, 0)),    # x1
            rep((1, C)), rep((1, C)),                               # ln_2 w, b
            pl.BlockSpec((C, cm), lambda b, r, c: (0, c)),          # w_fc chunk
            pl.BlockSpec((1, cm), lambda b, r, c: (0, c)),          # b_fc chunk
            pl.BlockSpec((cm, C), lambda b, r, c: (c, 0)),          # w_proj2 chunk
            rep((1, C)),                                            # b_proj2
        ],
        out_specs=pl.BlockSpec((1, tm, C), lambda b, r, c: (b, r, 0)),
        scratch_shapes=[
            pltpu.VMEM((tm, C), attn_dt),       # cached LN2 output
            pltpu.VMEM((tm, C), jnp.float32),   # MLP accumulator
        ],
        compiler_params=pltpu.CompilerParams(
            dimension_semantics=("parallel", "parallel", "arbitrary"),
            vmem_limit_bytes=_vmem_limit(k3_est)),
    )(x1, prep["ln2_w"], prep["ln2_b"],
      prep["w_fc"], prep["b_fc"], prep["w_p2"], prep["b_p2"])
    return out


def residual_attention_block(x, params, n_head, *, tq=None, tkv=None,
                             mlp_chunk=None, matmul_dtype=jnp.bfloat16,
                             single_buffer_weights=True, prepared=None):
    """Forward pass of the ResidualAttentionBlock.  `prepared` (from
    prepare_params) can be passed to amortize parameter prep across calls."""
    prep = prepare_params(params, n_head, matmul_dtype) if prepared is None else prepared
    kwargs = dict(tq=tq, tkv=tkv, mlp_chunk=mlp_chunk, matmul_dtype=matmul_dtype)
    if single_buffer_weights:
        try:
            return _forward(x, prep, n_head, single_buffer=True, **kwargs)
        except Exception:
            pass   # pl.Buffered(1) unsupported on this jax/libtpu: fall back.
    return _forward(x, prep, n_head, single_buffer=False, **kwargs)


def reference(x, p, n_head):
    """Pure-JAX replica of the PyTorch forward, for validation."""
    def ln(t, w, b):
        mu = t.mean(-1, keepdims=True)
        var = ((t - mu) ** 2).mean(-1, keepdims=True)
        return (t - mu) / jnp.sqrt(var + 1e-5) * w + b

    B, T, C = x.shape
    dh = C // n_head
    mask = jnp.tril(jnp.ones((T, T), x.dtype))
    h = ln(x, p["ln1_w"][0], p["ln1_b"][0])
    qkv = h @ p["w_qkv"] + p["b_qkv"][0]
    q, k, v = qkv[..., :C], qkv[..., C:2 * C], qkv[..., 2 * C:]
    q = q.reshape(B, T, n_head, dh).transpose(0, 2, 1, 3)
    k = k.reshape(B, T, n_head, dh).transpose(0, 2, 3, 1)
    v = v.reshape(B, T, n_head, dh).transpose(0, 2, 1, 3)
    s = (q @ k) / math.sqrt(dh)
    s = jnp.where(mask[None, None] == 0, -jnp.inf, s)
    a = jax.nn.softmax(s, axis=-1)
    o = (a @ v).transpose(0, 2, 1, 3).reshape(B, T, C)
    x = x + o @ p["w_proj"] + p["b_proj"][0]
    h = ln(x, p["ln2_w"][0], p["ln2_b"][0])
    fc = h @ p["w_fc"] + p["b_fc"][0]
    g = 0.5 * fc * (1 + jnp.tanh(math.sqrt(2 / math.pi) * (fc + 0.044715 * fc ** 3)))
    return x + g @ p["w_proj2"] + p["b_proj2"][0]


if __name__ == "__main__":
    B, T = 2, 8          # batch, sequence (n_ctx = 8)
    n_state, n_head, n_mlp = 32, 4, 64

    key = jax.random.PRNGKey(0)
    ks = jax.random.split(key, 9)
    sc = 0.1
    params = {
        # Linear weights stored as (in, out) == transposed torch layout.
        "w_qkv":   sc * jax.random.normal(ks[0], (n_state, 3 * n_state), jnp.float32),
        "b_qkv":   sc * jax.random.normal(ks[1], (1, 3 * n_state), jnp.float32),
        "w_proj":  sc * jax.random.normal(ks[2], (n_state, n_state), jnp.float32),
        "b_proj":  sc * jax.random.normal(ks[3], (1, n_state), jnp.float32),
        "w_fc":    sc * jax.random.normal(ks[4], (n_state, n_mlp), jnp.float32),
        "b_fc":    sc * jax.random.normal(ks[5], (1, n_mlp), jnp.float32),
        "w_proj2": sc * jax.random.normal(ks[6], (n_mlp, n_state), jnp.float32),
        "b_proj2": sc * jax.random.normal(ks[7], (1, n_state), jnp.float32),
        "ln1_w": jnp.ones((1, n_state), jnp.float32),
        "ln1_b": jnp.zeros((1, n_state), jnp.float32),
        "ln2_w": jnp.ones((1, n_state), jnp.float32),
        "ln2_b": jnp.zeros((1, n_state), jnp.float32),
    }

    x = jax.random.normal(ks[8], (B, T, n_state), jnp.float32)
    ref = reference(x, params, n_head)

    # Exact-math path (f32 MXU inputs) for strict validation.
    out_f32 = residual_attention_block(x, params, n_head, matmul_dtype=None)
    out_f32 = jax.block_until_ready(out_f32)
    assert out_f32.shape == (B, T, n_state)
    assert jnp.allclose(out_f32, ref, atol=1e-4, rtol=1e-4), "f32 mismatch vs reference"

    # Default production path: bf16 MXU inputs / bf16-cached Q,K,V (f32 accum).
    out_bf16 = residual_attention_block(x, params, n_head)
    out_bf16 = jax.block_until_ready(out_bf16)
    assert out_bf16.shape == (B, T, n_state)
    assert bool(jnp.all(jnp.isfinite(out_bf16)))
    assert float(jnp.max(jnp.abs(out_bf16 - ref))) < 0.1, "bf16 path diverged"

    print("KERNEL_OK")
</pallas_src>

<mosaic_0001>
module attributes {stable_mosaic.version = 11 : i64} {
  func.func @_qkv_proj_kernel(%arg0: i32, %arg1: i32, %arg2: memref<1x8x32xf32, #tpu.memory_space<vmem>>, %arg3: memref<1x32xf32, #tpu.memory_space<vmem>>, %arg4: memref<1x32xf32, #tpu.memory_space<vmem>>, %arg5: memref<32x32xf32, #tpu.memory_space<vmem>>, %arg6: memref<32x32xf32, #tpu.memory_space<vmem>>, %arg7: memref<32x32xf32, #tpu.memory_space<vmem>>, %arg8: memref<1x32xf32, #tpu.memory_space<vmem>>, %arg9: memref<1x32xf32, #tpu.memory_space<vmem>>, %arg10: memref<1x32xf32, #tpu.memory_space<vmem>>, %arg11: memref<1x8x32xf32, #tpu.memory_space<vmem>>, %arg12: memref<1x8x32xf32, #tpu.memory_space<vmem>>, %arg13: memref<1x8x32xf32, #tpu.memory_space<vmem>>) attributes {dimension_semantics = [#tpu.dimension_semantics<parallel>, #tpu.dimension_semantics<parallel>], iteration_bounds = array<i64: 2, 1>, scalar_prefetch = 0 : i64, scratch_operands = 0 : i64, tpu.core_type = #tpu.core_type<tc>, window_params = [{transform_indices = @transform_0, window_bounds = array<i64: 1, 8, 32>}, {pipeline_mode = #tpu.pipeline_mode<synchronous>, transform_indices = @transform_1, window_bounds = array<i64: 1, 32>}, {pipeline_mode = #tpu.pipeline_mode<synchronous>, transform_indices = @transform_2, window_bounds = array<i64: 1, 32>}, {pipeline_mode = #tpu.pipeline_mode<synchronous>, transform_indices = @transform_3, window_bounds = array<i64: 32, 32>}, {pipeline_mode = #tpu.pipeline_mode<synchronous>, transform_indices = @transform_4, window_bounds = array<i64: 32, 32>}, {pipeline_mode = #tpu.pipeline_mode<synchronous>, transform_indices = @transform_5, window_bounds = array<i64: 32, 32>}, {pipeline_mode = #tpu.pipeline_mode<synchronous>, transform_indices = @transform_6, window_bounds = array<i64: 1, 32>}, {pipeline_mode = #tpu.pipeline_mode<synchronous>, transform_indices = @transform_7, window_bounds = array<i64: 1, 32>}, {pipeline_mode = #tpu.pipeline_mode<synchronous>, transform_indices = @transform_8, window_bounds = array<i64: 1, 32>}, {transform_indices = @transform_9, window_bounds = array<i64: 1, 8, 32>}, {transform_indices = @transform_10, window_bounds = array<i64: 1, 8, 32>}, {transform_indices = @transform_11, window_bounds = array<i64: 1, 8, 32>}]} {
    %c0 = arith.constant 0 : index
    %c0_0 = arith.constant 0 : index
    %c0_1 = arith.constant 0 : index
    %0 = vector.load %arg2[%c0, %c0_0, %c0_1] : memref<1x8x32xf32, #tpu.memory_space<vmem>>, vector<1x8x32xf32>
    %1 = vector.shape_cast %0 : vector<1x8x32xf32> to vector<8x32xf32>
    %c0_2 = arith.constant 0 : index
    %c0_3 = arith.constant 0 : index
    %2 = vector.load %arg3[%c0_2, %c0_3] : memref<1x32xf32, #tpu.memory_space<vmem>>, vector<1x32xf32>
    %c0_4 = arith.constant 0 : index
    %c0_5 = arith.constant 0 : index
    %3 = vector.load %arg4[%c0_4, %c0_5] : memref<1x32xf32, #tpu.memory_space<vmem>>, vector<1x32xf32>
    %cst = arith.constant dense<0.000000e+00> : vector<8xf32>
    %4 = vector.multi_reduction <add>, %1, %cst [1] : vector<8x32xf32> to vector<8xf32>
    %5 = vector.shape_cast %4 : vector<8xf32> to vector<8x1xf32>
    %cst_6 = arith.constant 3.200000e+01 : f32
    %6 = vector.broadcast %cst_6 : f32 to vector<8x1xf32>
    %7 = arith.divf %5, %6 : vector<8x1xf32>
    %8 = vector.broadcast %7 : vector<8x1xf32> to vector<8x32xf32>
    %9 = arith.subf %1, %8 : vector<8x32xf32>
    %10 = arith.mulf %9, %9 : vector<8x32xf32>
    %cst_7 = arith.constant dense<0.000000e+00> : vector<8xf32>
    %11 = vector.multi_reduction <add>, %10, %cst_7 [1] : vector<8x32xf32> to vector<8xf32>
    %12 = vector.shape_cast %11 : vector<8xf32> to vector<8x1xf32>
    %cst_8 = arith.constant 3.200000e+01 : f32
    %13 = vector.broadcast %cst_8 : f32 to vector<8x1xf32>
    %14 = arith.divf %12, %13 : vector<8x1xf32>
    %15 = vector.broadcast %7 : vector<8x1xf32> to vector<8x32xf32>
    %16 = arith.subf %1, %15 : vector<8x32xf32>
    %cst_9 = arith.constant 9.99999974E-6 : f32
    %17 = vector.broadcast %cst_9 : f32 to vector<8x1xf32>
    %18 = arith.addf %14, %17 : vector<8x1xf32>
    %19 = math.rsqrt %18 : vector<8x1xf32>
    %20 = vector.broadcast %19 : vector<8x1xf32> to vector<8x32xf32>
    %21 = arith.mulf %16, %20 : vector<8x32xf32>
    %22 = vector.broadcast %2 : vector<1x32xf32> to vector<8x32xf32>
    %23 = arith.mulf %21, %22 : vector<8x32xf32>
    %24 = vector.broadcast %3 : vector<1x32xf32> to vector<8x32xf32>
    %25 = arith.addf %23, %24 : vector<8x32xf32>
    %c0_10 = arith.constant 0 : index
    %c0_11 = arith.constant 0 : index
    %26 = vector.load %arg5[%c0_10, %c0_11] : memref<32x32xf32, #tpu.memory_space<vmem>>, vector<32x32xf32>
    %cst_12 = arith.constant dense<0.000000e+00> : vector<8x32xf32>
    %27 = tpu.matmul %25, %26, %cst_12 {dimension_numbers = #tpu.dot_dimension_numbers<[1], [0], [0], [1], [0, 0, 1, 1], [], []>} : vector<8x32xf32>, vector<32x32xf32>, vector<8x32xf32> -> vector<8x32xf32>
    %c0_13 = arith.constant 0 : index
    %c0_14 = arith.constant 0 : index
    %28 = vector.load %arg8[%c0_13, %c0_14] : memref<1x32xf32, #tpu.memory_space<vmem>>, vector<1x32xf32>
    %29 = vector.broadcast %28 : vector<1x32xf32> to vector<8x32xf32>
    %30 = arith.addf %27, %29 : vector<8x32xf32>
    %c0_15 = arith.constant 0 : index
    %c0_16 = arith.constant 0 : index
    %31 = vector.load %arg6[%c0_15, %c0_16] : memref<32x32xf32, #tpu.memory_space<vmem>>, vector<32x32xf32>
    %cst_17 = arith.constant dense<0.000000e+00> : vector<8x32xf32>
    %32 = tpu.matmul %25, %31, %cst_17 {dimension_numbers = #tpu.dot_dimension_numbers<[1], [0], [0], [1], [0, 0, 1, 1], [], []>} : vector<8x32xf32>, vector<32x32xf32>, vector<8x32xf32> -> vector<8x32xf32>
    %c0_18 = arith.constant 0 : index
    %c0_19 = arith.constant 0 : index
    %33 = vector.load %arg9[%c0_18, %c0_19] : memref<1x32xf32, #tpu.memory_space<vmem>>, vector<1x32xf32>
    %34 = vector.broadcast %33 : vector<1x32xf32> to vector<8x32xf32>
    %35 = arith.addf %32, %34 : vector<8x32xf32>
    %c0_20 = arith.constant 0 : index
    %c0_21 = arith.constant 0 : index
    %36 = vector.load %arg7[%c0_20, %c0_21] : memref<32x32xf32, #tpu.memory_space<vmem>>, vector<32x32xf32>
    %cst_22 = arith.constant dense<0.000000e+00> : vector<8x32xf32>
    %37 = tpu.matmul %25, %36, %cst_22 {dimension_numbers = #tpu.dot_dimension_numbers<[1], [0], [0], [1], [0, 0, 1, 1], [], []>} : vector<8x32xf32>, vector<32x32xf32>, vector<8x32xf32> -> vector<8x32xf32>
    %c0_23 = arith.constant 0 : index
    %c0_24 = arith.constant 0 : index
    %38 = vector.load %arg10[%c0_23, %c0_24] : memref<1x32xf32, #tpu.memory_space<vmem>>, vector<1x32xf32>
    %39 = vector.broadcast %38 : vector<1x32xf32> to vector<8x32xf32>
    %40 = arith.addf %37, %39 : vector<8x32xf32>
    %c0_25 = arith.constant 0 : index
    %c0_26 = arith.constant 0 : index
    %c0_27 = arith.constant 0 : index
    %41 = vector.load %arg11[%c0_25, %c0_26, %c0_27] : memref<1x8x32xf32, #tpu.memory_space<vmem>>, vector<1x8x32xf32>
    %42 = vector.shape_cast %41 : vector<1x8x32xf32> to vector<8x32xf32>
    %43 = vector.shape_cast %30 : vector<8x32xf32> to vector<1x8x32xf32>
    tpu.vector_store %arg11[%c0_25, %c0_26, %c0_27], %43 {strides = array<i32>} : memref<1x8x32xf32, #tpu.memory_space<vmem>>, vector<1x8x32xf32>,
    %c0_28 = arith.constant 0 : index
    %c0_29 = arith.constant 0 : index
    %c0_30 = arith.constant 0 : index
    %44 = vector.load %arg12[%c0_28, %c0_29, %c0_30] : memref<1x8x32xf32, #tpu.memory_space<vmem>>, vector<1x8x32xf32>
    %45 = vector.shape_cast %44 : vector<1x8x32xf32> to vector<8x32xf32>
    %46 = vector.shape_cast %35 : vector<8x32xf32> to vector<1x8x32xf32>
    tpu.vector_store %arg12[%c0_28, %c0_29, %c0_30], %46 {strides = array<i32>} : memref<1x8x32xf32, #tpu.memory_space<vmem>>, vector<1x8x32xf32>,
    %c0_31 = arith.constant 0 : index
    %c0_32 = arith.constant 0 : index
    %c0_33 = arith.constant 0 : index
    %47 = vector.load %arg13[%c0_31, %c0_32, %c0_33] : memref<1x8x32xf32, #tpu.memory_space<vmem>>, vector<1x8x32xf32>
    %48 = vector.shape_cast %47 : vector<1x8x32xf32> to vector<8x32xf32>
    %49 = vector.shape_cast %40 : vector<8x32xf32> to vector<1x8x32xf32>
    tpu.vector_store %arg13[%c0_31, %c0_32, %c0_33], %49 {strides = array<i32>} : memref<1x8x32xf32, #tpu.memory_space<vmem>>, vector<1x8x32xf32>,
    return
  }
  func.func @transform_0(%arg0: i32, %arg1: i32) -> (i32, i32, i32) {
    %c0_i32 = arith.constant 0 : i32
    %c0_i32_0 = arith.constant 0 : i32
    return %arg0, %arg1, %c0_i32 : i32, i32, i32
  }
  func.func @transform_1(%arg0: i32, %arg1: i32) -> (i32, i32) {
    %c0_i32 = arith.constant 0 : i32
    %c0_i32_0 = arith.constant 0 : i32
    %c0_i32_1 = arith.constant 0 : i32
    return %c0_i32, %c0_i32_0 : i32, i32
  }
  func.func @transform_2(%arg0: i32, %arg1: i32) -> (i32, i32) {
    %c0_i32 = arith.constant 0 : i32
    %c0_i32_0 = arith.constant 0 : i32
    %c0_i32_1 = arith.constant 0 : i32
    return %c0_i32, %c0_i32_0 : i32, i32
  }
  func.func @transform_3(%arg0: i32, %arg1: i32) -> (i32, i32) {
    %c0_i32 = arith.constant 0 : i32
    %c0_i32_0 = arith.constant 0 : i32
    %c0_i32_1 = arith.constant 0 : i32
    return %c0_i32, %c0_i32_0 : i32, i32
  }
  func.func @transform_4(%arg0: i32, %arg1: i32) -> (i32, i32) {
    %c0_i32 = arith.constant 0 : i32
    %c0_i32_0 = arith.constant 0 : i32
    %c0_i32_1 = arith.constant 0 : i32
    return %c0_i32, %c0_i32_0 : i32, i32
  }
  func.func @transform_5(%arg0: i32, %arg1: i32) -> (i32, i32) {
    %c0_i32 = arith.constant 0 : i32
    %c0_i32_0 = arith.constant 0 : i32
    %c0_i32_1 = arith.constant 0 : i32
    return %c0_i32, %c0_i32_0 : i32, i32
  }
  func.func @transform_6(%arg0: i32, %arg1: i32) -> (i32, i32) {
    %c0_i32 = arith.constant 0 : i32
    %c0_i32_0 = arith.constant 0 : i32
    %c0_i32_1 = arith.constant 0 : i32
    return %c0_i32, %c0_i32_0 : i32, i32
  }
  func.func @transform_7(%arg0: i32, %arg1: i32) -> (i32, i32) {
    %c0_i32 = arith.constant 0 : i32
    %c0_i32_0 = arith.constant 0 : i32
    %c0_i32_1 = arith.constant 0 : i32
    return %c0_i32, %c0_i32_0 : i32, i32
  }
  func.func @transform_8(%arg0: i32, %arg1: i32) -> (i32, i32) {
    %c0_i32 = arith.constant 0 : i32
    %c0_i32_0 = arith.constant 0 : i32
    %c0_i32_1 = arith.constant 0 : i32
    return %c0_i32, %c0_i32_0 : i32, i32
  }
  func.func @transform_9(%arg0: i32, %arg1: i32) -> (i32, i32, i32) {
    %c0_i32 = arith.constant 0 : i32
    %c0_i32_0 = arith.constant 0 : i32
    return %arg0, %arg1, %c0_i32 : i32, i32, i32
  }
  func.func @transform_10(%arg0: i32, %arg1: i32) -> (i32, i32, i32) {
    %c0_i32 = arith.constant 0 : i32
    %c0_i32_0 = arith.constant 0 : i32
    return %arg0, %arg1, %c0_i32 : i32, i32, i32
  }
  func.func @transform_11(%arg0: i32, %arg1: i32) -> (i32, i32, i32) {
    %c0_i32 = arith.constant 0 : i32
    %c0_i32_0 = arith.constant 0 : i32
    return %arg0, %arg1, %c0_i32 : i32, i32, i32
  }
}

module attributes {stable_mosaic.version = 11 : i64} {
  func.func @_qkv_proj_kernel(%arg0: i32, %arg1: i32, %arg2: memref<1x8x32xf32, #tpu.memory_space<vmem>>, %arg3: memref<1x32xf32, #tpu.memory_space<vmem>>, %arg4: memref<1x32xf32, #tpu.memory_space<vmem>>, %arg5: memref<32x32xf32, #tpu.memory_space<vmem>>, %arg6: memref<32x32xf32, #tpu.memory_space<vmem>>, %arg7: memref<32x32xf32, #tpu.memory_space<vmem>>, %arg8: memref<1x32xf32, #tpu.memory_space<vmem>>, %arg9: memref<1x32xf32, #tpu.memory_space<vmem>>, %arg10: memref<1x32xf32, #tpu.memory_space<vmem>>, %arg11: memref<1x8x32xf32, #tpu.memory_space<vmem>>, %arg12: memref<1x8x32xf32, #tpu.memory_space<vmem>>, %arg13: memref<1x8x32xf32, #tpu.memory_space<vmem>>) attributes {dimension_semantics = [#tpu.dimension_semantics<parallel>, #tpu.dimension_semantics<parallel>], iteration_bounds = array<i64: 2, 1>, scalar_prefetch = 0 : i64, scratch_operands = 0 : i64, tpu.core_type = #tpu.core_type<tc>, window_params = [{transform_indices = @transform_0, window_bounds = array<i64: 1, 8, 32>}, {pipeline_mode = #tpu.pipeline_mode<synchronous>, transform_indices = @transform_1, window_bounds = array<i64: 1, 32>}, {pipeline_mode = #tpu.pipeline_mode<synchronous>, transform_indices = @transform_2, window_bounds = array<i64: 1, 32>}, {pipeline_mode = #tpu.pipeline_mode<synchronous>, transform_indices = @transform_3, window_bounds = array<i64: 32, 32>}, {pipeline_mode = #tpu.pipeline_mode<synchronous>, transform_indices = @transform_4, window_bounds = array<i64: 32, 32>}, {pipeline_mode = #tpu.pipeline_mode<synchronous>, transform_indices = @transform_5, window_bounds = array<i64: 32, 32>}, {pipeline_mode = #tpu.pipeline_mode<synchronous>, transform_indices = @transform_6, window_bounds = array<i64: 1, 32>}, {pipeline_mode = #tpu.pipeline_mode<synchronous>, transform_indices = @transform_7, window_bounds = array<i64: 1, 32>}, {pipeline_mode = #tpu.pipeline_mode<synchronous>, transform_indices = @transform_8, window_bounds = array<i64: 1, 32>}, {transform_indices = @transform_9, window_bounds = array<i64: 1, 8, 32>}, {transform_indices = @transform_10, window_bounds = array<i64: 1, 8, 32>}, {transform_indices = @transform_11, window_bounds = array<i64: 1, 8, 32>}]} {
    %c0 = arith.constant 0 : index
    %c0_0 = arith.constant 0 : index
    %c0_1 = arith.constant 0 : index
    %0 = vector.load %arg2[%c0, %c0_0, %c0_1] : memref<1x8x32xf32, #tpu.memory_space<vmem>>, vector<1x8x32xf32>
    %1 = vector.shape_cast %0 : vector<1x8x32xf32> to vector<8x32xf32>
    %c0_2 = arith.constant 0 : index
    %c0_3 = arith.constant 0 : index
    %2 = vector.load %arg3[%c0_2, %c0_3] : memref<1x32xf32, #tpu.memory_space<vmem>>, vector<1x32xf32>
    %c0_4 = arith.constant 0 : index
    %c0_5 = arith.constant 0 : index
    %3 = vector.load %arg4[%c0_4, %c0_5] : memref<1x32xf32, #tpu.memory_space<vmem>>, vector<1x32xf32>
    %cst = arith.constant dense<0.000000e+00> : vector<8xf32>
    %4 = vector.multi_reduction <add>, %1, %cst [1] : vector<8x32xf32> to vector<8xf32>
    %5 = vector.shape_cast %4 : vector<8xf32> to vector<8x1xf32>
    %cst_6 = arith.constant 3.200000e+01 : f32
    %6 = vector.broadcast %cst_6 : f32 to vector<8x1xf32>
    %7 = arith.divf %5, %6 : vector<8x1xf32>
    %8 = vector.broadcast %7 : vector<8x1xf32> to vector<8x32xf32>
    %9 = arith.subf %1, %8 : vector<8x32xf32>
    %10 = arith.mulf %9, %9 : vector<8x32xf32>
    %cst_7 = arith.constant dense<0.000000e+00> : vector<8xf32>
    %11 = vector.multi_reduction <add>, %10, %cst_7 [1] : vector<8x32xf32> to vector<8xf32>
    %12 = vector.shape_cast %11 : vector<8xf32> to vector<8x1xf32>
    %cst_8 = arith.constant 3.200000e+01 : f32
    %13 = vector.broadcast %cst_8 : f32 to vector<8x1xf32>
    %14 = arith.divf %12, %13 : vector<8x1xf32>
    %15 = vector.broadcast %7 : vector<8x1xf32> to vector<8x32xf32>
    %16 = arith.subf %1, %15 : vector<8x32xf32>
    %cst_9 = arith.constant 9.99999974E-6 : f32
    %17 = vector.broadcast %cst_9 : f32 to vector<8x1xf32>
    %18 = arith.addf %14, %17 : vector<8x1xf32>
    %19 = math.rsqrt %18 : vector<8x1xf32>
    %20 = vector.broadcast %19 : vector<8x1xf32> to vector<8x32xf32>
    %21 = arith.mulf %16, %20 : vector<8x32xf32>
    %22 = vector.broadcast %2 : vector<1x32xf32> to vector<8x32xf32>
    %23 = arith.mulf %21, %22 : vector<8x32xf32>
    %24 = vector.broadcast %3 : vector<1x32xf32> to vector<8x32xf32>
    %25 = arith.addf %23, %24 : vector<8x32xf32>
    %c0_10 = arith.constant 0 : index
    %c0_11 = arith.constant 0 : index
    %26 = vector.load %arg5[%c0_10, %c0_11] : memref<32x32xf32, #tpu.memory_space<vmem>>, vector<32x32xf32>
    %cst_12 = arith.constant dense<0.000000e+00> : vector<8x32xf32>
    %27 = tpu.matmul %25, %26, %cst_12 {dimension_numbers = #tpu.dot_dimension_numbers<[1], [0], [0], [1], [0, 0, 1, 1], [], []>} : vector<8x32xf32>, vector<32x32xf32>, vector<8x32xf32> -> vector<8x32xf32>
    %c0_13 = arith.constant 0 : index
    %c0_14 = arith.constant 0 : index
    %28 = vector.load %arg8[%c0_13, %c0_14] : memref<1x32xf32, #tpu.memory_space<vmem>>, vector<1x32xf32>
    %29 = vector.broadcast %28 : vector<1x32xf32> to vector<8x32xf32>
    %30 = arith.addf %27, %29 : vector<8x32xf32>
    %c0_15 = arith.constant 0 : index
    %c0_16 = arith.constant 0 : index
    %31 = vector.load %arg6[%c0_15, %c0_16] : memref<32x32xf32, #tpu.memory_space<vmem>>, vector<32x32xf32>
    %cst_17 = arith.constant dense<0.000000e+00> : vector<8x32xf32>
    %32 = tpu.matmul %25, %31, %cst_17 {dimension_numbers = #tpu.dot_dimension_numbers<[1], [0], [0], [1], [0, 0, 1, 1], [], []>} : vector<8x32xf32>, vector<32x32xf32>, vector<8x32xf32> -> vector<8x32xf32>
    %c0_18 = arith.constant 0 : index
    %c0_19 = arith.constant 0 : index
    %33 = vector.load %arg9[%c0_18, %c0_19] : memref<1x32xf32, #tpu.memory_space<vmem>>, vector<1x32xf32>
    %34 = vector.broadcast %33 : vector<1x32xf32> to vector<8x32xf32>
    %35 = arith.addf %32, %34 : vector<8x32xf32>
    %c0_20 = arith.constant 0 : index
    %c0_21 = arith.constant 0 : index
    %36 = vector.load %arg7[%c0_20, %c0_21] : memref<32x32xf32, #tpu.memory_space<vmem>>, vector<32x32xf32>
    %cst_22 = arith.constant dense<0.000000e+00> : vector<8x32xf32>
    %37 = tpu.matmul %25, %36, %cst_22 {dimension_numbers = #tpu.dot_dimension_numbers<[1], [0], [0], [1], [0, 0, 1, 1], [], []>} : vector<8x32xf32>, vector<32x32xf32>, vector<8x32xf32> -> vector<8x32xf32>
    %c0_23 = arith.constant 0 : index
    %c0_24 = arith.constant 0 : index
    %38 = vector.load %arg10[%c0_23, %c0_24] : memref<1x32xf32, #tpu.memory_space<vmem>>, vector<1x32xf32>
    %39 = vector.broadcast %38 : vector<1x32xf32> to vector<8x32xf32>
    %40 = arith.addf %37, %39 : vector<8x32xf32>
    %c0_25 = arith.constant 0 : index
    %c0_26 = arith.constant 0 : index
    %c0_27 = arith.constant 0 : index
    %41 = vector.load %arg11[%c0_25, %c0_26, %c0_27] : memref<1x8x32xf32, #tpu.memory_space<vmem>>, vector<1x8x32xf32>
    %42 = vector.shape_cast %41 : vector<1x8x32xf32> to vector<8x32xf32>
    %43 = vector.shape_cast %30 : vector<8x32xf32> to vector<1x8x32xf32>
    tpu.vector_store %arg11[%c0_25, %c0_26, %c0_27], %43 {strides = array<i32>} : memref<1x8x32xf32, #tpu.memory_space<vmem>>, vector<1x8x32xf32>,
    %c0_28 = arith.constant 0 : index
    %c0_29 = arith.constant 0 : index
    %c0_30 = arith.constant 0 : index
    %44 = vector.load %arg12[%c0_28, %c0_29, %c0_30] : memref<1x8x32xf32, #tpu.memory_space<vmem>>, vector<1x8x32xf32>
    %45 = vector.shape_cast %44 : vector<1x8x32xf32> to vector<8x32xf32>
    %46 = vector.shape_cast %35 : vector<8x32xf32> to vector<1x8x32xf32>
    tpu.vector_store %arg12[%c0_28, %c0_29, %c0_30], %46 {strides = array<i32>} : memref<1x8x32xf32, #tpu.memory_space<vmem>>, vector<1x8x32xf32>,
    %c0_31 = arith.constant 0 : index
    %c0_32 = arith.constant 0 : index
    %c0_33 = arith.constant 0 : index
    %47 = vector.load %arg13[%c0_31, %c0_32, %c0_33] : memref<1x8x32xf32, #tpu.memory_space<vmem>>, vector<1x8x32xf32>
    %48 = vector.shape_cast %47 : vector<1x8x32xf32> to vector<8x32xf32>
    %49 = vector.shape_cast %40 : vector<8x32xf32> to vector<1x8x32xf32>
    tpu.vector_store %arg13[%c0_31, %c0_32, %c0_33], %49 {strides = array<i32>} : memref<1x8x32xf32, #tpu.memory_space<vmem>>, vector<1x8x32xf32>,
    return
  }
  func.func @transform_0(%arg0: i32, %arg1: i32) -> (i32, i32, i32) {
    %c0_i32 = arith.constant 0 : i32
    %c0_i32_0 = arith.constant 0 : i32
    return %arg0, %arg1, %c0_i32 : i32, i32, i32
  }
  func.func @transform_1(%arg0: i32, %arg1: i32) -> (i32, i32) {
    %c0_i32 = arith.constant 0 : i32
    %c0_i32_0 = arith.constant 0 : i32
    %c0_i32_1 = arith.constant 0 : i32
    return %c0_i32, %c0_i32_0 : i32, i32
  }
  func.func @transform_2(%arg0: i32, %arg1: i32) -> (i32, i32) {
    %c0_i32 = arith.constant 0 : i32
    %c0_i32_0 = arith.constant 0 : i32
    %c0_i32_1 = arith.constant 0 : i32
    return %c0_i32, %c0_i32_0 : i32, i32
  }
  func.func @transform_3(%arg0: i32, %arg1: i32) -> (i32, i32) {
    %c0_i32 = arith.constant 0 : i32
    %c0_i32_0 = arith.constant 0 : i32
    %c0_i32_1 = arith.constant 0 : i32
    return %c0_i32, %c0_i32_0 : i32, i32
  }
  func.func @transform_4(%arg0: i32, %arg1: i32) -> (i32, i32) {
    %c0_i32 = arith.constant 0 : i32
    %c0_i32_0 = arith.constant 0 : i32
    %c0_i32_1 = arith.constant 0 : i32
    return %c0_i32, %c0_i32_0 : i32, i32
  }
  func.func @transform_5(%arg0: i32, %arg1: i32) -> (i32, i32) {
    %c0_i32 = arith.constant 0 : i32
    %c0_i32_0 = arith.constant 0 : i32
    %c0_i32_1 = arith.constant 0 : i32
    return %c0_i32, %c0_i32_0 : i32, i32
  }
  func.func @transform_6(%arg0: i32, %arg1: i32) -> (i32, i32) {
    %c0_i32 = arith.constant 0 : i32
    %c0_i32_0 = arith.constant 0 : i32
    %c0_i32_1 = arith.constant 0 : i32
    return %c0_i32, %c0_i32_0 : i32, i32
  }
  func.func @transform_7(%arg0: i32, %arg1: i32) -> (i32, i32) {
    %c0_i32 = arith.constant 0 : i32
    %c0_i32_0 = arith.constant 0 : i32
    %c0_i32_1 = arith.constant 0 : i32
    return %c0_i32, %c0_i32_0 : i32, i32
  }
  func.func @transform_8(%arg0: i32, %arg1: i32) -> (i32, i32) {
    %c0_i32 = arith.constant 0 : i32
    %c0_i32_0 = arith.constant 0 : i32
    %c0_i32_1 = arith.constant 0 : i32
    return %c0_i32, %c0_i32_0 : i32, i32
  }
  func.func @transform_9(%arg0: i32, %arg1: i32) -> (i32, i32, i32) {
    %c0_i32 = arith.constant 0 : i32
    %c0_i32_0 = arith.constant 0 : i32
    return %arg0, %arg1, %c0_i32 : i32, i32, i32
  }
  func.func @transform_10(%arg0: i32, %arg1: i32) -> (i32, i32, i32) {
    %c0_i32 = arith.constant 0 : i32
    %c0_i32_0 = arith.constant 0 : i32
    return %arg0, %arg1, %c0_i32 : i32, i32, i32
  }
  func.func @transform_11(%arg0: i32, %arg1: i32) -> (i32, i32, i32) {
    %c0_i32 = arith.constant 0 : i32
    %c0_i32_0 = arith.constant 0 : i32
    return %arg0, %arg1, %c0_i32 : i32, i32, i32
  }
}

</mosaic_0001>

<llo_original>
// kernel: tpu_custom_call.1
$region0: #{tpu_custom_call.1}
  #allocation0 [shape = 'u32[]', space=smem, size = 0x4, offset = 0x4, fixed_abs, tag = 'smem constant byte address 0x4 - core index']
  #allocation1 [shape = 'u32[144,128]{1,0:T(1,128)}', space=vmem, size = 0x12000, scoped, tag = 'internal scratch']
  %s0 = inlined_call_operand.hbm [shape: f32[2,8,32], index: 0, kind: input, shape index: {}]
  %s1 = inlined_call_operand.vmem [shape: f32[1,32], index: 1, kind: input, shape index: {}]
  %s2 = inlined_call_operand.vmem [shape: f32[1,32], index: 2, kind: input, shape index: {}]
  %s3 = inlined_call_operand.hbm [shape: f32[32,32], index: 3, kind: input, shape index: {}]
  %s4 = inlined_call_operand.hbm [shape: f32[32,32], index: 4, kind: input, shape index: {}]
  %s5 = inlined_call_operand.hbm [shape: f32[32,32], index: 5, kind: input, shape index: {}]
  %s6 = inlined_call_operand.vmem [shape: f32[1,32], index: 6, kind: input, shape index: {}]
  %s7 = inlined_call_operand.vmem [shape: f32[1,32], index: 7, kind: input, shape index: {}]
  %s8 = inlined_call_operand.vmem [shape: f32[1,32], index: 8, kind: input, shape index: {}]
  %s9 = inlined_call_operand.hbm [shape: f32[2,8,32], index: 9, kind: output, shape index: {0}]
  %s10 = inlined_call_operand.hbm [shape: f32[2,8,32], index: 10, kind: output, shape index: {1}]
  %s11 = inlined_call_operand.hbm [shape: f32[2,8,32], index: 11, kind: output, shape index: {2}]
  %12 = xla_tuple %s9, %s10, %s11
  %s13 = sld [smem:[#allocation0]]
  $region101: #{tpu_custom_call.1} parent=0
    _
  %s15 = ssub.s32 1, %s13
  %s16 = scalar_select 0, %s15, %s13
  $region1: #{tpu_custom_call.1} parent=0
    #allocation2 [shape = 'u8[8192]{0}', space=vmem, size = 0x2000, scoped, tag = 'input window, operand 0']
    #allocation3 [shape = 's32[2]{0}', space=sflag, size = 0x8, scoped, tag = 'scoped memory for tpu_custom_call.1']
    #allocation4 [shape = 's32[2]{0}', space=sflag, size = 0x8, scoped, tag = 'scoped memory for tpu_custom_call.1']
    #allocation5 [shape = 'u8[16384]{0}', space=vmem, size = 0x4000, scoped, tag = 'input window, operand 3, single buffered']
    #allocation6 [shape = 's32[1]{0}', space=sflag, size = 0x4, scoped, tag = 'scoped memory for tpu_custom_call.1']
    #allocation7 [shape = 'u8[16384]{0}', space=vmem, size = 0x4000, scoped, tag = 'input window, operand 4, single buffered']
    #allocation8 [shape = 'u8[16384]{0}', space=vmem, size = 0x4000, scoped, tag = 'input window, operand 5, single buffered']
    #allocation9 [shape = 's32[1]{0}', space=sflag, size = 0x4, scoped, tag = 'scoped memory for tpu_custom_call.1']
    #allocation10 [shape = 'u8[8192]{0}', space=vmem, size = 0x2000, scoped, tag = 'output window, operand 0']
    #allocation11 [shape = 'u8[8192]{0}', space=vmem, size = 0x2000, scoped, tag = 'output window, operand 1']
    #allocation12 [shape = 's32[2]{0}', space=sflag, size = 0x8, scoped, tag = 'scoped memory for tpu_custom_call.1']
    #allocation13 [shape = 'u8[8192]{0}', space=vmem, size = 0x2000, scoped, tag = 'output window, operand 2']
    %17 = vsyncpa [#allocation3], 0
    %s18 = scalar_lea.sflag [#allocation3], 1
    %19 = vsyncpa %s18, 0
    %20 = vsyncpa [#allocation6], 0
    %21 = vsyncpa [#allocation9], 0
    %22 = vsyncpa [#allocation4], 0
    %s23 = scalar_lea.sflag [#allocation4], 1
    %24 = vsyncpa %s23, 0
    %25 = vsyncpa [#allocation12], 0
    %s26 = scalar_lea.sflag [#allocation12], 1
    %27 = vsyncpa %s26, 0
    loop: start=0, step=1, limit=4
    $region2: #{tpu_custom_call.1} parent=1 // loop_pre_header
      _
    $region3: #{tpu_custom_call.1} parent=1 // loop_header
      %s29 = sphi 0, %s33
      %p30 = scmp.ge.s32.totalorder %s29, 4
      %s36 = sphi 0, %s48
      %s37 = sphi 0, %s44
      %s38 = sphi 0, %s36
      %s39 = sphi 0, %s37
      %s40 = sphi 0, %s38
      %s41 = sphi 0, %s39
      %s53 = sphi 0, %s55
      %s56 = sphi 0, %s53
      %s57 = sphi 0, %s56
      %s73 = sphi 0, %s57
      %s77 = sphi 0, %s77
      %s79 = sphi 0, %s77
      %s80 = sphi 0, %s79
      %s94 = sphi 0, %s80
      %s98 = sphi 0, %s98
      %s100 = sphi 0, %s98
      %s101 = sphi 0, %s100
      %s115 = sphi 0, %s101
      %s119 = sphi 0, %s119
      %s121 = sphi 0, %s119
      %s122 = sphi 0, %s121
      %s136 = sphi 0, %s122
      %s140 = sphi 0, %s140
      %s142 = sphi 0, %s140
      %s143 = sphi 0, %s142
      %s157 = sphi 0, %s143
      %s161 = sphi 0, %s161
      %s163 = sphi 0, %s161
      %s164 = sphi 0, %s163
      %s178 = sphi 0, %s164
      %s182 = sphi 0, %s182
      %s184 = sphi 0, %s182
      %s185 = sphi 0, %s184
      %s199 = sphi 0, %s185
      %s203 = sphi 0, %s203
      %s205 = sphi 0, %s203
      %s206 = sphi 0, %s205
      %s220 = sphi 0, %s206
      %s224 = sphi 0, %s224
      %s226 = sphi 0, %s224
      %s227 = sphi 0, %s226
      %s241 = sphi 0, %s227
      %s249 = sphi 0, %s251
      %s252 = sphi 0, %s249
      %s253 = sphi 0, %s252
      %s269 = sphi 0, %s253
      %s277 = sphi 0, %s279
      %s280 = sphi 0, %s277
      %s281 = sphi 0, %s280
      %s297 = sphi 0, %s281
      %s305 = sphi 0, %s307
      %s308 = sphi 0, %s305
      %s309 = sphi 0, %s308
      %s325 = sphi 0, %s309
    $region4: #{tpu_custom_call.1} parent=1 // loop_header_branch
      %32 = sbr.rel (%p30) target = $region8
    $region5: #{tpu_custom_call.1} parent=1 // loop_body
      %s34 = ssub.s32 %s29, 1
      %s35 = ssub.s32 %s29, 2
      %s42 = sadd.s32 1, %s37
      %p43 = scmp.ge.s32.totalorder %s42, 1
      %s44 = scalar_select %p43, 0, %s42
      %s45 = sadd.s32 1, %s36
      %s46 = scalar_select %p43, %s45, %s36
      %p47 = scmp.ge.s32.totalorder %s46, 2
      %s48 = scalar_select %p47, 0, %s46
      %s49 = ssub.s32 %s36, %s48
      %s50 = ssub.s32 %s37, %s44
      %s51 = sor.u32 %s49, %s50
      %p52 = scmp.eq.s32.totalorder %s51, 0
      %s54 = sadd.s32 %s53, 1
      %s55 = scalar_select %p52, %s53, %s54
      %p58 = pneg %p52
      %p59 = scmp.eq.s32.totalorder %s29, 1
      %p60 = por %p58, %p59
      %p61 = scmp.ne.s32.totalorder %s53, %s56
      %p62 = scmp.eq.s32.totalorder %s29, 0
      %p63 = por %p61, %p62
      %p64 = scmp.ne.s32.totalorder %s53, %s56
      %p65 = scmp.eq.s32.totalorder %s34, 1
      %p66 = por %p64, %p65
      %p67 = scmp.ne.s32.totalorder %s56, %s57
      %p68 = scmp.eq.s32.totalorder %s34, 0
      %p69 = por %p67, %p68
      %p70 = scmp.ne.s32.totalorder %s56, %s57
      %p71 = scmp.eq.s32.totalorder %s35, 1
      %p72 = por %p70, %p71
      %p74 = scmp.ne.s32.totalorder %s57, %s73
      %p75 = scmp.eq.s32.totalorder %s35, 0
      %p76 = por %p74, %p75
      %s78 = sadd.s32 %s77, 1
      %p81 = scmp.eq.s32.totalorder %s29, 1
      %p82 = scmp.ne.s32.totalorder %s77, %s79
      %p83 = scmp.eq.s32.totalorder %s29, 0
      %p84 = por %p82, %p83
      %p85 = scmp.ne.s32.totalorder %s77, %s79
      %p86 = scmp.eq.s32.totalorder %s34, 1
      %p87 = por %p85, %p86
      %p88 = scmp.ne.s32.totalorder %s79, %s80
      %p89 = scmp.eq.s32.totalorder %s34, 0
      %p90 = por %p88, %p89
      %p91 = scmp.ne.s32.totalorder %s79, %s80
      %p92 = scmp.eq.s32.totalorder %s35, 1
      %p93 = por %p91, %p92
      %p95 = scmp.ne.s32.totalorder %s80, %s94
      %p96 = scmp.eq.s32.totalorder %s35, 0
      %p97 = por %p95, %p96
      %s99 = sadd.s32 %s98, 1
      %p102 = scmp.eq.s32.totalorder %s29, 1
      %p103 = scmp.ne.s32.totalorder %s98, %s100
      %p104 = scmp.eq.s32.totalorder %s29, 0
      %p105 = por %p103, %p104
      %p106 = scmp.ne.s32.totalorder %s98, %s100
      %p107 = scmp.eq.s32.totalorder %s34, 1
      %p108 = por %p106, %p107
      %p109 = scmp.ne.s32.totalorder %s100, %s101
      %p110 = scmp.eq.s32.totalorder %s34, 0
      %p111 = por %p109, %p110
      %p112 = scmp.ne.s32.totalorder %s100, %s101
      %p113 = scmp.eq.s32.totalorder %s35, 1
      %p114 = por %p112, %p113
      %p116 = scmp.ne.s32.totalorder %s101, %s115
      %p117 = scmp.eq.s32.totalorder %s35, 0
      %p118 = por %p116, %p117
      %s120 = sadd.s32 %s119, 1
      %p123 = scmp.eq.s32.totalorder %s29, 1
      %p124 = scmp.ne.s32.totalorder %s119, %s121
      %p125 = scmp.eq.s32.totalorder %s29, 0
      %p126 = por %p124, %p125
      %p127 = scmp.ne.s32.totalorder %s119, %s121
      %p128 = scmp.eq.s32.totalorder %s34, 1
      %p129 = por %p127, %p128
      %p130 = scmp.ne.s32.totalorder %s121, %s122
      %p131 = scmp.eq.s32.totalorder %s34, 0
      %p132 = por %p130, %p131
      %p133 = scmp.ne.s32.totalorder %s121, %s122
      %p134 = scmp.eq.s32.totalorder %s35, 1
      %p135 = por %p133, %p134
      %p137 = scmp.ne.s32.totalorder %s122, %s136
      %p138 = scmp.eq.s32.totalorder %s35, 0
      %p139 = por %p137, %p138
      %s141 = sadd.s32 %s140, 1
      %p144 = scmp.eq.s32.totalorder %s29, 1
      %p145 = scmp.ne.s32.totalorder %s140, %s142
      %p146 = scmp.eq.s32.totalorder %s29, 0
      %p147 = por %p145, %p146
      %p148 = scmp.ne.s32.totalorder %s140, %s142
      %p149 = scmp.eq.s32.totalorder %s34, 1
      %p150 = por %p148, %p149
      %p151 = scmp.ne.s32.totalorder %s142, %s143
      %p152 = scmp.eq.s32.totalorder %s34, 0
      %p153 = por %p151, %p152
      %p154 = scmp.ne.s32.totalorder %s142, %s143
      %p155 = scmp.eq.s32.totalorder %s35, 1
      %p156 = por %p154, %p155
      %p158 = scmp.ne.s32.totalorder %s143, %s157
      %p159 = scmp.eq.s32.totalorder %s35, 0
      %p160 = por %p158, %p159
      %s162 = sadd.s32 %s161, 1
      %p165 = scmp.eq.s32.totalorder %s29, 1
      %p166 = scmp.ne.s32.totalorder %s161, %s163
      %p167 = scmp.eq.s32.totalorder %s29, 0
      %p168 = por %p166, %p167
      %p169 = scmp.ne.s32.totalorder %s161, %s163
      %p170 = scmp.eq.s32.totalorder %s34, 1
      %p171 = por %p169, %p170
      %p172 = scmp.ne.s32.totalorder %s163, %s164
      %p173 = scmp.eq.s32.totalorder %s34, 0
      %p174 = por %p172, %p173
      %p175 = scmp.ne.s32.totalorder %s163, %s164
      %p176 = scmp.eq.s32.totalorder %s35, 1
      %p177 = por %p175, %p176
      %p179 = scmp.ne.s32.totalorder %s164, %s178
      %p180 = scmp.eq.s32.totalorder %s35, 0
      %p181 = por %p179, %p180
      %s183 = sadd.s32 %s182, 1
      %p186 = scmp.eq.s32.totalorder %s29, 1
      %p187 = scmp.ne.s32.totalorder %s182, %s184
      %p188 = scmp.eq.s32.totalorder %s29, 0
      %p189 = por %p187, %p188
      %p190 = scmp.ne.s32.totalorder %s182, %s184
      %p191 = scmp.eq.s32.totalorder %s34, 1
      %p192 = por %p190, %p191
      %p193 = scmp.ne.s32.totalorder %s184, %s185
      %p194 = scmp.eq.s32.totalorder %s34, 0
      %p195 = por %p193, %p194
      %p196 = scmp.ne.s32.totalorder %s184, %s185
      %p197 = scmp.eq.s32.totalorder %s35, 1
      %p198 = por %p196, %p197
      %p200 = scmp.ne.s32.totalorder %s185, %s199
      %p201 = scmp.eq.s32.totalorder %s35, 0
      %p202 = por %p200, %p201
      %s204 = sadd.s32 %s203, 1
      %p207 = scmp.eq.s32.totalorder %s29, 1
      %p208 = scmp.ne.s32.totalorder %s203, %s205
      %p209 = scmp.eq.s32.totalorder %s29, 0
      %p210 = por %p208, %p209
      %p211 = scmp.ne.s32.totalorder %s203, %s205
      %p212 = scmp.eq.s32.totalorder %s34, 1
      %p213 = por %p211, %p212
      %p214 = scmp.ne.s32.totalorder %s205, %s206
      %p215 = scmp.eq.s32.totalorder %s34, 0
      %p216 = por %p214, %p215
      %p217 = scmp.ne.s32.totalorder %s205, %s206
      %p218 = scmp.eq.s32.totalorder %s35, 1
      %p219 = por %p217, %p218
      %p221 = scmp.ne.s32.totalorder %s206, %s220
      %p222 = scmp.eq.s32.totalorder %s35, 0
      %p223 = por %p221, %p222
      %s225 = sadd.s32 %s224, 1
      %p228 = scmp.eq.s32.totalorder %s29, 1
      %p229 = scmp.ne.s32.totalorder %s224, %s226
      %p230 = scmp.eq.s32.totalorder %s29, 0
      %p231 = por %p229, %p230
      %p232 = scmp.ne.s32.totalorder %s224, %s226
      %p233 = scmp.eq.s32.totalorder %s34, 1
      %p234 = por %p232, %p233
      %p235 = scmp.ne.s32.totalorder %s226, %s227
      %p236 = scmp.eq.s32.totalorder %s34, 0
      %p237 = por %p235, %p236
      %p238 = scmp.ne.s32.totalorder %s226, %s227
      %p239 = scmp.eq.s32.totalorder %s35, 1
      %p240 = por %p238, %p239
      %p242 = scmp.ne.s32.totalorder %s227, %s241
      %p243 = scmp.eq.s32.totalorder %s35, 0
      %p244 = por %p242, %p243
      %s245 = ssub.s32 %s36, %s48
      %s246 = ssub.s32 %s37, %s44
      %s247 = sor.u32 %s245, %s246
      %p248 = scmp.eq.s32.totalorder %s247, 0
      %s250 = sadd.s32 %s249, 1
      %s251 = scalar_select %p248, %s249, %s250
      %p254 = pneg %p248
      %p255 = scmp.eq.s32.totalorder %s29, 1
      %p256 = por %p254, %p255
      %p257 = scmp.ne.s32.totalorder %s249, %s252
      %p258 = scmp.eq.s32.totalorder %s29, 0
      %p259 = por %p257, %p258
      %p260 = scmp.ne.s32.totalorder %s249, %s252
      %p261 = scmp.eq.s32.totalorder %s34, 1
      %p262 = por %p260, %p261
      %p263 = scmp.ne.s32.totalorder %s252, %s253
      %p264 = scmp.eq.s32.totalorder %s34, 0
      %p265 = por %p263, %p264
      %p266 = scmp.ne.s32.totalorder %s252, %s253
      %p267 = scmp.eq.s32.totalorder %s35, 1
      %p268 = por %p266, %p267
      %p270 = scmp.ne.s32.totalorder %s253, %s269
      %p271 = scmp.eq.s32.totalorder %s35, 0
      %p272 = por %p270, %p271
      %s273 = ssub.s32 %s36, %s48
      %s274 = ssub.s32 %s37, %s44
      %s275 = sor.u32 %s273, %s274
      %p276 = scmp.eq.s32.totalorder %s275, 0
      %s278 = sadd.s32 %s277, 1
      %s279 = scalar_select %p276, %s277, %s278
      %p282 = pneg %p276
      %p283 = scmp.eq.s32.totalorder %s29, 1
      %p284 = por %p282, %p283
      %p285 = scmp.ne.s32.totalorder %s277, %s280
      %p286 = scmp.eq.s32.totalorder %s29, 0
      %p287 = por %p285, %p286
      %p288 = scmp.ne.s32.totalorder %s277, %s280
      %p289 = scmp.eq.s32.totalorder %s34, 1
      %p290 = por %p288, %p289
      %p291 = scmp.ne.s32.totalorder %s280, %s281
      %p292 = scmp.eq.s32.totalorder %s34, 0
      %p293 = por %p291, %p292
      %p294 = scmp.ne.s32.totalorder %s280, %s281
      %p295 = scmp.eq.s32.totalorder %s35, 1
      %p296 = por %p294, %p295
      %p298 = scmp.ne.s32.totalorder %s281, %s297
      %p299 = scmp.eq.s32.totalorder %s35, 0
      %p300 = por %p298, %p299
      %s301 = ssub.s32 %s36, %s48
      %s302 = ssub.s32 %s37, %s44
      %s303 = sor.u32 %s301, %s302
      %p304 = scmp.eq.s32.totalorder %s303, 0
      %s306 = sadd.s32 %s305, 1
      %s307 = scalar_select %p304, %s305, %s306
      %p310 = pneg %p304
      %p311 = scmp.eq.s32.totalorder %s29, 1
      %p312 = por %p310, %p311
      %p313 = scmp.ne.s32.totalorder %s305, %s308
      %p314 = scmp.eq.s32.totalorder %s29, 0
      %p315 = por %p313, %p314
      %p316 = scmp.ne.s32.totalorder %s305, %s308
      %p317 = scmp.eq.s32.totalorder %s34, 1
      %p318 = por %p316, %p317
      %p319 = scmp.ne.s32.totalorder %s308, %s309
      %p320 = scmp.eq.s32.totalorder %s34, 0
      %p321 = por %p319, %p320
      %p322 = scmp.ne.s32.totalorder %s308, %s309
      %p323 = scmp.eq.s32.totalorder %s35, 1
      %p324 = por %p322, %p323
      %p326 = scmp.ne.s32.totalorder %s309, %s325
      %p327 = scmp.eq.s32.totalorder %s35, 0
      %p328 = por %p326, %p327
      %p329 = scmp.le.s32.totalorder 1, %s29
      %p330 = scmp.lt.s32.totalorder %s29, 3
      %p331 = pnand %p329, %p330
      %p332 = pneg %p331
      // Predicated region
      $region9: #{tpu_custom_call.1} parent=5 // pred_check
        _
      $region10: #{tpu_custom_call.1} parent=5 // pred_check_branch
        %334 = sbr.rel (%p331) target = $region12
      $region11: #{tpu_custom_call.1} parent=5 // pred_region
        %s335 = ssub.s32 %s29, 1
        // Predicated region
        $region13: #{tpu_custom_call.1} parent=11 // pred_check
          %p336 = pneg %p90
        $region14: #{tpu_custom_call.1} parent=11 // pred_check_branch
          %338 = sbr.rel (%p336) target = $region16
        $region15: #{tpu_custom_call.1} parent=11 // pred_region
          _
        $region16: #{tpu_custom_call.1} parent=11 // pred_fallthru
          _
        // Predicated region
        $region17: #{tpu_custom_call.1} parent=11 // pred_check
          %p339 = pneg %p111
        $region18: #{tpu_custom_call.1} parent=11 // pred_check_branch
          %341 = sbr.rel (%p339) target = $region20
        $region19: #{tpu_custom_call.1} parent=11 // pred_region
          _
        $region20: #{tpu_custom_call.1} parent=11 // pred_fallthru
          _
        // Predicated region
        $region21: #{tpu_custom_call.1} parent=11 // pred_check
          %p342 = pneg %p132
        $region22: #{tpu_custom_call.1} parent=11 // pred_check_branch
          %344 = sbr.rel (%p342) target = $region24
        $region23: #{tpu_custom_call.1} parent=11 // pred_region
          %s346 = ssub.s32 512, 512
          %347 = vsyncadd [#allocation6], %s346
          %s348 = sshll.u32 [#allocation5], 4
          %s349 = int_to_ptr.vmem [resolvable:$true] %s348
          %354 = dma.hbm_to_vmem [thread:$0]  %s3, 512, %s349, [#allocation6], 128, 128, 8
        $region24: #{tpu_custom_call.1} parent=11 // pred_fallthru
          _
        // Predicated region
        $region25: #{tpu_custom_call.1} parent=11 // pred_check
          %p355 = pneg %p153
        $region26: #{tpu_custom_call.1} parent=11 // pred_check_branch
          %357 = sbr.rel (%p355) target = $region28
        $region27: #{tpu_custom_call.1} parent=11 // pred_region
          %s359 = ssub.s32 512, 512
          %360 = vsyncadd [#allocation6], %s359
          %s361 = sshll.u32 [#allocation7], 4
          %s362 = int_to_ptr.vmem [resolvable:$true] %s361
          %367 = dma.hbm_to_vmem [thread:$0]  %s4, 512, %s362, [#allocation6], 128, 128, 8
        $region28: #{tpu_custom_call.1} parent=11 // pred_fallthru
          _
        // Predicated region
        $region29: #{tpu_custom_call.1} parent=11 // pred_check
          %p368 = pneg %p174
        $region30: #{tpu_custom_call.1} parent=11 // pred_check_branch
          %370 = sbr.rel (%p368) target = $region32
        $region31: #{tpu_custom_call.1} parent=11 // pred_region
          %s372 = ssub.s32 512, 512
          %373 = vsyncadd [#allocation9], %s372
          %s374 = sshll.u32 [#allocation8], 4
          %s375 = int_to_ptr.vmem [resolvable:$true] %s374
          %380 = dma.hbm_to_vmem [thread:$0]  %s5, 512, %s375, [#allocation9], 128, 128, 8
        $region32: #{tpu_custom_call.1} parent=11 // pred_fallthru
          _
        // Predicated region
        $region33: #{tpu_custom_call.1} parent=11 // pred_check
          %p381 = pneg %p195
        $region34: #{tpu_custom_call.1} parent=11 // pred_check_branch
          %383 = sbr.rel (%p381) target = $region36
        $region35: #{tpu_custom_call.1} parent=11 // pred_region
          _
        $region36: #{tpu_custom_call.1} parent=11 // pred_fallthru
          _
        // Predicated region
        $region37: #{tpu_custom_call.1} parent=11 // pred_check
          %p384 = pneg %p216
        $region38: #{tpu_custom_call.1} parent=11 // pred_check_branch
          %386 = sbr.rel (%p384) target = $region40
        $region39: #{tpu_custom_call.1} parent=11 // pred_region
          _
        $region40: #{tpu_custom_call.1} parent=11 // pred_fallthru
          _
        // Predicated region
        $region41: #{tpu_custom_call.1} parent=11 // pred_check
          %p387 = pneg %p237
        $region42: #{tpu_custom_call.1} parent=11 // pred_check_branch
          %389 = sbr.rel (%p387) target = $region44
        $region43: #{tpu_custom_call.1} parent=11 // pred_region
          _
        $region44: #{tpu_custom_call.1} parent=11 // pred_fallthru
          _
      $region12: #{tpu_custom_call.1} parent=5 // pred_fallthru
        _
      %p390 = scmp.lt.s32.totalorder %s29, 2
      // Predicated region
      $region45: #{tpu_custom_call.1} parent=5 // pred_check
        %p391 = pneg %p390
      $region46: #{tpu_custom_call.1} parent=5 // pred_check_branch
        %393 = sbr.rel (%p391) target = $region48
      $region47: #{tpu_custom_call.1} parent=5 // pred_region
        // Predicated region
        $region49: #{tpu_custom_call.1} parent=47 // pred_check
          %p394 = pneg %p63
        $region50: #{tpu_custom_call.1} parent=47 // pred_check_branch
          %396 = sbr.rel (%p394) target = $region52
        $region51: #{tpu_custom_call.1} parent=47 // pred_region
          %s397 = sand.u32 %s53, 1
          %s398 = scalar_lea.sflag [#allocation3], %s397
          %s399 = sand.u32 %s53, 1
          %s400 = smul.addr %s399, 8
          %s401 = scalar_lea.vmem [#allocation2], %s400
          %s403 = ssub.s32 128, 128
          %404 = vsyncadd %s398, %s403
          %s405 = sadd.s32 %s37, %s36
          %s406 = smul.addr %s405, 128
          %s407 = scalar_lea.hbm %s0, %s406
          %s409 = sshll.u32 %s401, 4
          %s410 = int_to_ptr.vmem [resolvable:$true] %s409
          %412 = dma.hbm_to_vmem [thread:$0]  %s407, 128, %s410, %s398
        $region52: #{tpu_custom_call.1} parent=47 // pred_fallthru
          _
      $region48: #{tpu_custom_call.1} parent=5 // pred_fallthru
        _
      %p413 = scmp.le.s32.totalorder 1, %s29
      %p414 = scmp.lt.s32.totalorder %s29, 3
      %p415 = pnand %p413, %p414
      %p416 = pneg %p415
      // Predicated region
      $region53: #{tpu_custom_call.1} parent=5 // pred_check
        _
      $region54: #{tpu_custom_call.1} parent=5 // pred_check_branch
        %418 = sbr.rel (%p415) target = $region56
      $region55: #{tpu_custom_call.1} parent=5 // pred_region
        %s419 = ssub.s32 %s29, 1
        %s420 = sand.u32 %s56, 1
        %s421 = scalar_lea.sflag [#allocation3], %s420
        %s422 = sand.u32 %s56, 1
        %s423 = smul.addr %s422, 8
        %s424 = scalar_lea.vmem [#allocation2], %s423
        // Predicated region
        $region57: #{tpu_custom_call.1} parent=55 // pred_check
          %p425 = pneg %p69
        $region58: #{tpu_custom_call.1} parent=55 // pred_check_branch
          %427 = sbr.rel (%p425) target = $region60
        $region59: #{tpu_custom_call.1} parent=55 // pred_region
          %428 = dma.done %s421, 128
        $region60: #{tpu_custom_call.1} parent=55 // pred_fallthru
          _
        // Predicated region
        $region61: #{tpu_custom_call.1} parent=55 // pred_check
          %p429 = pneg %p132
        $region62: #{tpu_custom_call.1} parent=55 // pred_check_branch
          %431 = sbr.rel (%p429) target = $region64
        $region63: #{tpu_custom_call.1} parent=55 // pred_region
          %432 = dma.done [#allocation6], 512
        $region64: #{tpu_custom_call.1} parent=55 // pred_fallthru
          _
        // Predicated region
        $region65: #{tpu_custom_call.1} parent=55 // pred_check
          %p433 = pneg %p153
        $region66: #{tpu_custom_call.1} parent=55 // pred_check_branch
          %435 = sbr.rel (%p433) target = $region68
        $region67: #{tpu_custom_call.1} parent=55 // pred_region
          %436 = dma.done [#allocation6], 512
        $region68: #{tpu_custom_call.1} parent=55 // pred_fallthru
          _
        // Predicated region
        $region69: #{tpu_custom_call.1} parent=55 // pred_check
          %p437 = pneg %p174
        $region70: #{tpu_custom_call.1} parent=55 // pred_check_branch
          %439 = sbr.rel (%p437) target = $region72
        $region71: #{tpu_custom_call.1} parent=55 // pred_region
          %440 = dma.done [#allocation9], 512
        $region72: #{tpu_custom_call.1} parent=55 // pred_fallthru
          _
        %s441 = sand.u32 %s56, 1
        %s442 = scalar_lea.sflag [#allocation3], %s441
        %s443 = sand.u32 %s56, 1
        %s444 = smul.addr %s443, 8
        %s445 = scalar_lea.vmem [#allocation2], %s444
        %p446 = pneg %p69
        %p447 = pneg %p66
        %p448 = pneg %p90
        %p449 = pneg %p87
        %p450 = pneg %p111
        %p451 = pneg %p108
        %p452 = pneg %p132
        %p453 = pneg %p129
        %p454 = pneg %p153
        %p455 = pneg %p150
        %p456 = pneg %p174
        %p457 = pneg %p171
        %p458 = pneg %p195
        %p459 = pneg %p192
        %p460 = pneg %p216
        %p461 = pneg %p213
        %p462 = pneg %p237
        %p463 = pneg %p234
        %p464 = pneg %p265
        %p465 = pneg %p262
        %s466 = sand.u32 %s252, 1
        %s467 = scalar_lea.sflag [#allocation4], %s466
        %s468 = sand.u32 %s252, 1
        %s469 = smul.addr %s468, 8
        %s470 = scalar_lea.vmem [#allocation10], %s469
        %p471 = pneg %p293
        %p472 = pneg %p290
        %s473 = sand.u32 %s34, 1
        %s474 = scalar_lea.sflag [#allocation12], %s473
        %s475 = sand.u32 %s280, 1
        %s476 = smul.addr %s475, 8
        %s477 = scalar_lea.vmem [#allocation11], %s476
        %p478 = pneg %p321
        %p479 = pneg %p318
        %s480 = sand.u32 %s34, 1
        %s481 = scalar_lea.sflag [#allocation12], %s480
        %s482 = sand.u32 %s308, 1
        %s483 = smul.addr %s482, 8
        %s484 = scalar_lea.vmem [#allocation13], %s483
        %v485 = vld [vmem:[%s424] sm:$0xff]
        %v486 = vld [vmem:[%s1] sm:$0x1]
        %v487 = vld [vmem:[%s2] sm:$0x1]
        %vm488 = vcmask 261120
        %v489 = vsel %vm488, %v485, 0.0
        %490 = vadd.xlane.f32.xlu0 %v489
        %v491 = vpop.xlane.xlu0 %490
        %v492 = vrcp.pop 32.0
        %v493 = vmul.f32 %v491, %v492
        %v494 = vsub.f32 %v485, %v493
        %v495 = vmul.f32 %v494, %v494
        %v496 = vsel %vm488, %v495, 0.0
        %497 = vadd.xlane.f32.xlu0 %v496
        %v498 = vpop.xlane.xlu0 %497
        %v499 = vmul.f32 %v498, %v492
        %v500 = vadd.f32 %v499, 1e-05
        %v501 = vrsqrt.pop %v500
        %v502 = vmul.f32 %v494, %v501
        %v504 = vlaneseq
        %v505 = vshrl.u32 %v504, 7
        %v506 = vsub.s32 0, %v505
        %v507 = vrot.slane %v486, %v506
        %v509 = vmul.f32 %v502, %v507
        %v511 = vlaneseq
        %v512 = vshrl.u32 %v511, 7
        %v513 = vsub.s32 0, %v512
        %v514 = vrot.slane %v487, %v513
        %v516 = vadd.f32 %v509, %v514
        %v517 = vld [vmem:[#allocation5] sm:$0xff]
        %v518 = vld [vmem:[#allocation5 + $0x8] sm:$0xff]
        %v519 = vld [vmem:[#allocation5 + $0x10] sm:$0xff]
        %v520 = vld [vmem:[#allocation5 + $0x18] sm:$0xff]
        %v521 = vld [vmem:[%s6] sm:$0x1]
        %v523 = vlaneseq
        %v524 = vshrl.u32 %v523, 7
        %v525 = vsub.s32 0, %v524
        %v526 = vrot.slane %v521, %v525
        %v529 = vsel %vm488, %v516, 0
        %531 = vmatprep.subr.mxu0 0.0
        %532 = vmatpush1.msra.mxu0 %v517
        %533 = vmatprep.subr.mxu0 0.0
        %534 = vmatpush1.msra.mxu0 %v518
        %535 = vmatprep.subr.mxu0 0.0
        %536 = vmatpush1.msra.mxu0 %v519
        %537 = vmatprep.subr.mxu0 0.0
        %538 = vmatpush1.msra.mxu0 %v520
        %539 = vmatprep.subr.mxu0 0.0
        %540 = vmatpush1.msra.mxu0 0.0
        %541 = vmatprep.subr.mxu0 0.0
        %542 = vmatpush1.msra.mxu0 0.0
        %543 = vmatprep.subr.mxu0 0.0
        %544 = vmatpush1.msra.mxu0 0.0
        %545 = vmatprep.subr.mxu0 0.0
        %546 = vmatpush1.msra.mxu0 0.0
        %547 = vmatprep.subr.mxu0 0.0
        %548 = vmatpush1.msra.mxu0 0.0
        %549 = vmatprep.subr.mxu0 0.0
        %550 = vmatpush1.msra.mxu0 0.0
        %551 = vmatprep.subr.mxu0 0.0
        %552 = vmatpush1.msra.mxu0 0.0
        %553 = vmatprep.subr.mxu0 0.0
        %554 = vmatpush1.msra.mxu0 0.0
        %555 = vmatprep.subr.mxu0 0.0
        %556 = vmatpush1.msra.mxu0 0.0
        %557 = vmatprep.subr.mxu0 0.0
        %558 = vmatpush1.msra.mxu0 0.0
        %559 = vmatprep.subr.mxu0 0.0
        %560 = vmatpush1.msra.mxu0 0.0
        %561 = vmatprep.subr.mxu0 0.0
        %562 = vmatpush1.msra.mxu0 0.0
        %563 = vmatprep.subr.mxu0 0.0
        %564 = vmatpush1.msra.mxu0 0.0
        %565 = vmatprep.subr.mxu0 0.0
        %566 = vmatpush1.msra.mxu0 0.0
        %567 = vmatprep.subr.mxu0 0.0
        %568 = vmatpush1.msra.mxu0 0.0
        %569 = vmatprep.subr.mxu0 0.0
        %570 = vmatpush1.msra.mxu0 0.0
        %571 = vmatprep.subr.mxu0 0.0
        %572 = vmatpush1.msra.mxu0 0.0
        %573 = vmatprep.subr.mxu0 0.0
        %574 = vmatpush1.msra.mxu0 0.0
        %575 = vmatprep.subr.mxu0 0.0
        %576 = vmatpush1.msra.mxu0 0.0
        %577 = vmatprep.subr.mxu0 0.0
        %578 = vmatpush1.msra.mxu0 0.0
        %579 = vmatprep.subr.mxu0 0.0
        %580 = vmatpush1.msra.mxu0 0.0
        %581 = vmatprep.subr.mxu0 0.0
        %582 = vmatpush1.msra.mxu0 0.0
        %583 = vmatprep.subr.mxu0 0.0
        %584 = vmatpush1.msra.mxu0 0.0
        %585 = vmatprep.subr.mxu0 0.0
        %586 = vmatpush1.msra.mxu0 0.0
        %587 = vmatprep.subr.mxu0 0.0
        %588 = vmatpush1.msra.mxu0 0.0
        %589 = vmatprep.subr.mxu0 0.0
        %590 = vmatpush1.msra.mxu0 0.0
        %591 = vmatprep.subr.mxu0 0.0
        %592 = vmatpush1.msra.mxu0 0.0
        %593 = vmatprep.subr.mxu0 0.0
        %594 = vmatpush1.msra.mxu0 0.0
        %595 = vmatprep.mubr.f32.mxu0 0.0
        %596 = vmatmul.mubr.f32.gmra.mrb[0].mxu0 %v529
        %v597 = vpop.f32.mrb[0].mxu0
        %v598 = vadd.f32 %v526, %v597
        %v599 = vpop.f32.mrb[0].mxu0
        %600 = vdwg.mxu0
        %v601 = vld [vmem:[#allocation7] sm:$0xff]
        %v602 = vld [vmem:[#allocation7 + $0x8] sm:$0xff]
        %v603 = vld [vmem:[#allocation7 + $0x10] sm:$0xff]
        %v604 = vld [vmem:[#allocation7 + $0x18] sm:$0xff]
        %v605 = vld [vmem:[%s7] sm:$0x1]
        %v607 = vlaneseq
        %v608 = vshrl.u32 %v607, 7
        %v609 = vsub.s32 0, %v608
        %v610 = vrot.slane %v605, %v609
        %612 = vmatprep.subr.mxu0 0.0
        %613 = vmatpush1.msra.mxu0 %v601
        %614 = vmatprep.subr.mxu0 0.0
        %615 = vmatpush1.msra.mxu0 %v602
        %616 = vmatprep.subr.mxu0 0.0
        %617 = vmatpush1.msra.mxu0 %v603
        %618 = vmatprep.subr.mxu0 0.0
        %619 = vmatpush1.msra.mxu0 %v604
        %620 = vmatprep.subr.mxu0 0.0
        %621 = vmatpush1.msra.mxu0 0.0
        %622 = vmatprep.subr.mxu0 0.0
        %623 = vmatpush1.msra.mxu0 0.0
        %624 = vmatprep.subr.mxu0 0.0
        %625 = vmatpush1.msra.mxu0 0.0
        %626 = vmatprep.subr.mxu0 0.0
        %627 = vmatpush1.msra.mxu0 0.0
        %628 = vmatprep.subr.mxu0 0.0
        %629 = vmatpush1.msra.mxu0 0.0
        %630 = vmatprep.subr.mxu0 0.0
        %631 = vmatpush1.msra.mxu0 0.0
        %632 = vmatprep.subr.mxu0 0.0
        %633 = vmatpush1.msra.mxu0 0.0
        %634 = vmatprep.subr.mxu0 0.0
        %635 = vmatpush1.msra.mxu0 0.0
        %636 = vmatprep.subr.mxu0 0.0
        %637 = vmatpush1.msra.mxu0 0.0
        %638 = vmatprep.subr.mxu0 0.0
        %639 = vmatpush1.msra.mxu0 0.0
        %640 = vmatprep.subr.mxu0 0.0
        %641 = vmatpush1.msra.mxu0 0.0
        %642 = vmatprep.subr.mxu0 0.0
        %643 = vmatpush1.msra.mxu0 0.0
        %644 = vmatprep.subr.mxu0 0.0
        %645 = vmatpush1.msra.mxu0 0.0
        %646 = vmatprep.subr.mxu0 0.0
        %647 = vmatpush1.msra.mxu0 0.0
        %648 = vmatprep.subr.mxu0 0.0
        %649 = vmatpush1.msra.mxu0 0.0
        %650 = vmatprep.subr.mxu0 0.0
        %651 = vmatpush1.msra.mxu0 0.0
        %652 = vmatprep.subr.mxu0 0.0
        %653 = vmatpush1.msra.mxu0 0.0
        %654 = vmatprep.subr.mxu0 0.0
        %655 = vmatpush1.msra.mxu0 0.0
        %656 = vmatprep.subr.mxu0 0.0
        %657 = vmatpush1.msra.mxu0 0.0
        %658 = vmatprep.subr.mxu0 0.0
        %659 = vmatpush1.msra.mxu0 0.0
        %660 = vmatprep.subr.mxu0 0.0
        %661 = vmatpush1.msra.mxu0 0.0
        %662 = vmatprep.subr.mxu0 0.0
        %663 = vmatpush1.msra.mxu0 0.0
        %664 = vmatprep.subr.mxu0 0.0
        %665 = vmatpush1.msra.mxu0 0.0
        %666 = vmatprep.subr.mxu0 0.0
        %667 = vmatpush1.msra.mxu0 0.0
        %668 = vmatprep.subr.mxu0 0.0
        %669 = vmatpush1.msra.mxu0 0.0
        %670 = vmatprep.subr.mxu0 0.0
        %671 = vmatpush1.msra.mxu0 0.0
        %672 = vmatprep.subr.mxu0 0.0
        %673 = vmatpush1.msra.mxu0 0.0
        %674 = vmatprep.subr.mxu0 0.0
        %675 = vmatpush1.msra.mxu0 0.0
        %676 = vmatprep.mubr.f32.mxu0 0.0
        %677 = vmatmul.mubr.f32.gmra.mrb[0].mxu0 %v529
        %v678 = vpop.f32.mrb[0].mxu0
        %v679 = vadd.f32 %v610, %v678
        %v680 = vpop.f32.mrb[0].mxu0
        %681 = vdwg.mxu0
        %v682 = vld [vmem:[#allocation8] sm:$0xff]
        %v683 = vld [vmem:[#allocation8 + $0x8] sm:$0xff]
        %v684 = vld [vmem:[#allocation8 + $0x10] sm:$0xff]
        %v685 = vld [vmem:[#allocation8 + $0x18] sm:$0xff]
        %v686 = vld [vmem:[%s8] sm:$0x1]
        %v688 = vlaneseq
        %v689 = vshrl.u32 %v688, 7
        %v690 = vsub.s32 0, %v689
        %v691 = vrot.slane %v686, %v690
        %693 = vmatprep.subr.mxu0 0.0
        %694 = vmatpush1.msra.mxu0 %v682
        %695 = vmatprep.subr.mxu0 0.0
        %696 = vmatpush1.msra.mxu0 %v683
        %697 = vmatprep.subr.mxu0 0.0
        %698 = vmatpush1.msra.mxu0 %v684
        %699 = vmatprep.subr.mxu0 0.0
        %700 = vmatpush1.msra.mxu0 %v685
        %701 = vmatprep.subr.mxu0 0.0
        %702 = vmatpush1.msra.mxu0 0.0
        %703 = vmatprep.subr.mxu0 0.0
        %704 = vmatpush1.msra.mxu0 0.0
        %705 = vmatprep.subr.mxu0 0.0
        %706 = vmatpush1.msra.mxu0 0.0
        %707 = vmatprep.subr.mxu0 0.0
        %708 = vmatpush1.msra.mxu0 0.0
        %709 = vmatprep.subr.mxu0 0.0
        %710 = vmatpush1.msra.mxu0 0.0
        %711 = vmatprep.subr.mxu0 0.0
        %712 = vmatpush1.msra.mxu0 0.0
        %713 = vmatprep.subr.mxu0 0.0
        %714 = vmatpush1.msra.mxu0 0.0
        %715 = vmatprep.subr.mxu0 0.0
        %716 = vmatpush1.msra.mxu0 0.0
        %717 = vmatprep.subr.mxu0 0.0
        %718 = vmatpush1.msra.mxu0 0.0
        %719 = vmatprep.subr.mxu0 0.0
        %720 = vmatpush1.msra.mxu0 0.0
        %721 = vmatprep.subr.mxu0 0.0
        %722 = vmatpush1.msra.mxu0 0.0
        %723 = vmatprep.subr.mxu0 0.0
        %724 = vmatpush1.msra.mxu0 0.0
        %725 = vmatprep.subr.mxu0 0.0
        %726 = vmatpush1.msra.mxu0 0.0
        %727 = vmatprep.subr.mxu0 0.0
        %728 = vmatpush1.msra.mxu0 0.0
        %729 = vmatprep.subr.mxu0 0.0
        %730 = vmatpush1.msra.mxu0 0.0
        %731 = vmatprep.subr.mxu0 0.0
        %732 = vmatpush1.msra.mxu0 0.0
        %733 = vmatprep.subr.mxu0 0.0
        %734 = vmatpush1.msra.mxu0 0.0
        %735 = vmatprep.subr.mxu0 0.0
        %736 = vmatpush1.msra.mxu0 0.0
        %737 = vmatprep.subr.mxu0 0.0
        %738 = vmatpush1.msra.mxu0 0.0
        %739 = vmatprep.subr.mxu0 0.0
        %740 = vmatpush1.msra.mxu0 0.0
        %741 = vmatprep.subr.mxu0 0.0
        %742 = vmatpush1.msra.mxu0 0.0
        %743 = vmatprep.subr.mxu0 0.0
        %744 = vmatpush1.msra.mxu0 0.0
        %745 = vmatprep.subr.mxu0 0.0
        %746 = vmatpush1.msra.mxu0 0.0
        %747 = vmatprep.subr.mxu0 0.0
        %748 = vmatpush1.msra.mxu0 0.0
        %749 = vmatprep.subr.mxu0 0.0
        %750 = vmatpush1.msra.mxu0 0.0
        %751 = vmatprep.subr.mxu0 0.0
        %752 = vmatpush1.msra.mxu0 0.0
        %753 = vmatprep.subr.mxu0 0.0
        %754 = vmatpush1.msra.mxu0 0.0
        %755 = vmatprep.subr.mxu0 0.0
        %756 = vmatpush1.msra.mxu0 0.0
        %757 = vmatprep.mubr.f32.mxu0 0.0
        %758 = vmatmul.mubr.f32.gmra.mrb[0].mxu0 %v529
        %v759 = vpop.f32.mrb[0].mxu0
        %v760 = vadd.f32 %v691, %v759
        %v761 = vpop.f32.mrb[0].mxu0
        %762 = vdwg.mxu0
        %763 = vst.msk [vmem:[%s470] sm:$0xff] %vm488, %v598
        %764 = vst.msk [vmem:[%s477] sm:$0xff] %vm488, %v679
        %765 = vst.msk [vmem:[%s484] sm:$0xff] %vm488, %v760
        %s766 = sand.u32 %s252, 1
        %s767 = scalar_lea.sflag [#allocation4], %s766
        %s768 = sand.u32 %s252, 1
        %s769 = smul.addr %s768, 8
        %s770 = scalar_lea.vmem [#allocation10], %s769
        %s771 = sand.u32 %s34, 1
        %s772 = scalar_lea.sflag [#allocation12], %s771
        %s773 = sand.u32 %s280, 1
        %s774 = smul.addr %s773, 8
        %s775 = scalar_lea.vmem [#allocation11], %s774
        %s776 = sand.u32 %s34, 1
        %s777 = scalar_lea.sflag [#allocation12], %s776
        %s778 = sand.u32 %s308, 1
        %s779 = smul.addr %s778, 8
        %s780 = scalar_lea.vmem [#allocation13], %s779
        // Predicated region
        $region73: #{tpu_custom_call.1} parent=55 // pred_check
          %p781 = pneg %p262
        $region74: #{tpu_custom_call.1} parent=55 // pred_check_branch
          %783 = sbr.rel (%p781) target = $region76
        $region75: #{tpu_custom_call.1} parent=55 // pred_region
          %s785 = ssub.s32 128, 128
          %786 = vsyncadd %s767, %s785
          %s787 = sadd.s32 %s39, %s38
          %s788 = smul.addr %s787, 128
          %s789 = scalar_lea.hbm %s9, %s788
          %s791 = sshll.u32 %s770, 4
          %s792 = int_to_ptr.vmem [resolvable:$true] %s791
          %794 = dma.vmem_to_hbm [thread:$0]  %s792, 128, %s789, %s767
        $region76: #{tpu_custom_call.1} parent=55 // pred_fallthru
          _
        // Predicated region
        $region77: #{tpu_custom_call.1} parent=55 // pred_check
          %p795 = pneg %p290
        $region78: #{tpu_custom_call.1} parent=55 // pred_check_branch
          %797 = sbr.rel (%p795) target = $region80
        $region79: #{tpu_custom_call.1} parent=55 // pred_region
          %s799 = ssub.s32 128, 128
          %800 = vsyncadd %s772, %s799
          %s801 = sadd.s32 %s39, %s38
          %s802 = smul.addr %s801, 128
          %s803 = scalar_lea.hbm %s10, %s802
          %s805 = sshll.u32 %s775, 4
          %s806 = int_to_ptr.vmem [resolvable:$true] %s805
          %808 = dma.vmem_to_hbm [thread:$0]  %s806, 128, %s803, %s772
        $region80: #{tpu_custom_call.1} parent=55 // pred_fallthru
          _
        // Predicated region
        $region81: #{tpu_custom_call.1} parent=55 // pred_check
          %p809 = pneg %p318
        $region82: #{tpu_custom_call.1} parent=55 // pred_check_branch
          %811 = sbr.rel (%p809) target = $region84
        $region83: #{tpu_custom_call.1} parent=55 // pred_region
          %s813 = ssub.s32 128, 128
          %814 = vsyncadd %s777, %s813
          %s815 = sadd.s32 %s39, %s38
          %s816 = smul.addr %s815, 128
          %s817 = scalar_lea.hbm %s11, %s816
          %s819 = sshll.u32 %s780, 4
          %s820 = int_to_ptr.vmem [resolvable:$true] %s819
          %822 = dma.vmem_to_hbm [thread:$0]  %s820, 128, %s817, %s777
        $region84: #{tpu_custom_call.1} parent=55 // pred_fallthru
          _
      $region56: #{tpu_custom_call.1} parent=5 // pred_fallthru
        _
      %p823 = scmp.le.s32.totalorder 2, %s29
      // Predicated region
      $region85: #{tpu_custom_call.1} parent=5 // pred_check
        %p824 = pneg %p823
      $region86: #{tpu_custom_call.1} parent=5 // pred_check_branch
        %826 = sbr.rel (%p824) target = $region88
      $region87: #{tpu_custom_call.1} parent=5 // pred_region
        %s827 = ssub.s32 %s29, 2
        // Predicated region
        $region89: #{tpu_custom_call.1} parent=87 // pred_check
          %p828 = pneg %p268
        $region90: #{tpu_custom_call.1} parent=87 // pred_check_branch
          %830 = sbr.rel (%p828) target = $region92
        $region91: #{tpu_custom_call.1} parent=87 // pred_region
          %s831 = sand.u32 %s253, 1
          %s832 = scalar_lea.sflag [#allocation4], %s831
          %s833 = sand.u32 %s253, 1
          %s834 = smul.addr %s833, 8
          %s835 = scalar_lea.vmem [#allocation10], %s834
          %836 = dma.done %s832, 128
        $region92: #{tpu_custom_call.1} parent=87 // pred_fallthru
          _
        // Predicated region
        $region93: #{tpu_custom_call.1} parent=87 // pred_check
          %p837 = pneg %p296
        $region94: #{tpu_custom_call.1} parent=87 // pred_check_branch
          %839 = sbr.rel (%p837) target = $region96
        $region95: #{tpu_custom_call.1} parent=87 // pred_region
          %s840 = sand.u32 %s35, 1
          %s841 = scalar_lea.sflag [#allocation12], %s840
          %s842 = sand.u32 %s281, 1
          %s843 = smul.addr %s842, 8
          %s844 = scalar_lea.vmem [#allocation11], %s843
          %845 = dma.done %s841, 128
        $region96: #{tpu_custom_call.1} parent=87 // pred_fallthru
          _
        // Predicated region
        $region97: #{tpu_custom_call.1} parent=87 // pred_check
          %p846 = pneg %p324
        $region98: #{tpu_custom_call.1} parent=87 // pred_check_branch
          %848 = sbr.rel (%p846) target = $region100
        $region99: #{tpu_custom_call.1} parent=87 // pred_region
          %s849 = sand.u32 %s35, 1
          %s850 = scalar_lea.sflag [#allocation12], %s849
          %s851 = sand.u32 %s309, 1
          %s852 = smul.addr %s851, 8
          %s853 = scalar_lea.vmem [#allocation13], %s852
          %854 = dma.done %s850, 128
        $region100: #{tpu_custom_call.1} parent=87 // pred_fallthru
          _
      $region88: #{tpu_custom_call.1} parent=5 // pred_fallthru
        _
    $region6: #{tpu_custom_call.1} parent=1 // loop_footer
      %s33 = sadd.s32 1, %s29
    $region7: #{tpu_custom_call.1} parent=1 // loop_footer_branch
      %28 = sbr.rel target = $region3
    $region8: #{tpu_custom_call.1} parent=1 // loop_exit
      _
    %855 = vsyncpa [#allocation3], 1
    %s856 = scalar_lea.sflag [#allocation3], 1
    %857 = vsyncpa %s856, 1
    %858 = vsyncpa [#allocation6], 1
    %859 = vsyncpa [#allocation9], 1
    %860 = vsyncpa [#allocation4], 1
    %s861 = scalar_lea.sflag [#allocation4], 1
    %862 = vsyncpa %s861, 1
    %863 = vsyncpa [#allocation12], 1
    %s864 = scalar_lea.sflag [#allocation12], 1
    %865 = vsyncpa %s864, 1

// kernel: tpu_custom_call.1
$region0: #{tpu_custom_call.1}
  #allocation0 [shape = 'u32[]', space=smem, size = 0x4, offset = 0x4, fixed_abs, tag = 'smem constant byte address 0x4 - core index']
  #allocation1 [shape = 'u32[144,128]{1,0:T(1,128)}', space=vmem, size = 0x12000, scoped, tag = 'internal scratch']
  %s0 = inlined_call_operand.hbm [shape: f32[2,8,32], index: 0, kind: input, shape index: {}]
  %s1 = inlined_call_operand.vmem [shape: f32[1,32], index: 1, kind: input, shape index: {}]
  %s2 = inlined_call_operand.vmem [shape: f32[1,32], index: 2, kind: input, shape index: {}]
  %s3 = inlined_call_operand.hbm [shape: f32[32,32], index: 3, kind: input, shape index: {}]
  %s4 = inlined_call_operand.hbm [shape: f32[32,32], index: 4, kind: input, shape index: {}]
  %s5 = inlined_call_operand.hbm [shape: f32[32,32], index: 5, kind: input, shape index: {}]
  %s6 = inlined_call_operand.vmem [shape: f32[1,32], index: 6, kind: input, shape index: {}]
  %s7 = inlined_call_operand.vmem [shape: f32[1,32], index: 7, kind: input, shape index: {}]
  %s8 = inlined_call_operand.vmem [shape: f32[1,32], index: 8, kind: input, shape index: {}]
  %s9 = inlined_call_operand.hbm [shape: f32[2,8,32], index: 9, kind: output, shape index: {0}]
  %s10 = inlined_call_operand.hbm [shape: f32[2,8,32], index: 10, kind: output, shape index: {1}]
  %s11 = inlined_call_operand.hbm [shape: f32[2,8,32], index: 11, kind: output, shape index: {2}]
  %12 = xla_tuple %s9, %s10, %s11
  %s13 = sld [smem:[#allocation0]]
  $region101: #{tpu_custom_call.1} parent=0
    _
  %s15 = ssub.s32 1, %s13
  %s16 = scalar_select 0, %s15, %s13
  $region1: #{tpu_custom_call.1} parent=0
    #allocation2 [shape = 'u8[8192]{0}', space=vmem, size = 0x2000, scoped, tag = 'input window, operand 0']
    #allocation3 [shape = 's32[2]{0}', space=sflag, size = 0x8, scoped, tag = 'scoped memory for tpu_custom_call.1']
    #allocation4 [shape = 's32[2]{0}', space=sflag, size = 0x8, scoped, tag = 'scoped memory for tpu_custom_call.1']
    #allocation5 [shape = 'u8[16384]{0}', space=vmem, size = 0x4000, scoped, tag = 'input window, operand 3, single buffered']
    #allocation6 [shape = 's32[1]{0}', space=sflag, size = 0x4, scoped, tag = 'scoped memory for tpu_custom_call.1']
    #allocation7 [shape = 'u8[16384]{0}', space=vmem, size = 0x4000, scoped, tag = 'input window, operand 4, single buffered']
    #allocation8 [shape = 'u8[16384]{0}', space=vmem, size = 0x4000, scoped, tag = 'input window, operand 5, single buffered']
    #allocation9 [shape = 's32[1]{0}', space=sflag, size = 0x4, scoped, tag = 'scoped memory for tpu_custom_call.1']
    #allocation10 [shape = 'u8[8192]{0}', space=vmem, size = 0x2000, scoped, tag = 'output window, operand 0']
    #allocation11 [shape = 'u8[8192]{0}', space=vmem, size = 0x2000, scoped, tag = 'output window, operand 1']
    #allocation12 [shape = 's32[2]{0}', space=sflag, size = 0x8, scoped, tag = 'scoped memory for tpu_custom_call.1']
    #allocation13 [shape = 'u8[8192]{0}', space=vmem, size = 0x2000, scoped, tag = 'output window, operand 2']
    %17 = vsyncpa [#allocation3], 0
    %s18 = scalar_lea.sflag [#allocation3], 1
    %19 = vsyncpa %s18, 0
    %20 = vsyncpa [#allocation6], 0
    %21 = vsyncpa [#allocation9], 0
    %22 = vsyncpa [#allocation4], 0
    %s23 = scalar_lea.sflag [#allocation4], 1
    %24 = vsyncpa %s23, 0
    %25 = vsyncpa [#allocation12], 0
    %s26 = scalar_lea.sflag [#allocation12], 1
    %27 = vsyncpa %s26, 0
    loop: start=0, step=1, limit=4
    $region2: #{tpu_custom_call.1} parent=1 // loop_pre_header
      _
    $region3: #{tpu_custom_call.1} parent=1 // loop_header
      %s29 = sphi 0, %s33
      %p30 = scmp.ge.s32.totalorder %s29, 4
      %s36 = sphi 0, %s48
      %s37 = sphi 0, %s44
      %s38 = sphi 0, %s36
      %s39 = sphi 0, %s37
      %s40 = sphi 0, %s38
      %s41 = sphi 0, %s39
      %s53 = sphi 0, %s55
      %s56 = sphi 0, %s53
      %s57 = sphi 0, %s56
      %s73 = sphi 0, %s57
      %s77 = sphi 0, %s77
      %s79 = sphi 0, %s77
      %s80 = sphi 0, %s79
      %s94 = sphi 0, %s80
      %s98 = sphi 0, %s98
      %s100 = sphi 0, %s98
      %s101 = sphi 0, %s100
      %s115 = sphi 0, %s101
      %s119 = sphi 0, %s119
      %s121 = sphi 0, %s119
      %s122 = sphi 0, %s121
      %s136 = sphi 0, %s122
      %s140 = sphi 0, %s140
      %s142 = sphi 0, %s140
      %s143 = sphi 0, %s142
      %s157 = sphi 0, %s143
      %s161 = sphi 0, %s161
      %s163 = sphi 0, %s161
      %s164 = sphi 0, %s163
      %s178 = sphi 0, %s164
      %s182 = sphi 0, %s182
      %s184 = sphi 0, %s182
      %s185 = sphi 0, %s184
      %s199 = sphi 0, %s185
      %s203 = sphi 0, %s203
      %s205 = sphi 0, %s203
      %s206 = sphi 0, %s205
      %s220 = sphi 0, %s206
      %s224 = sphi 0, %s224
      %s226 = sphi 0, %s224
      %s227 = sphi 0, %s226
      %s241 = sphi 0, %s227
      %s249 = sphi 0, %s251
      %s252 = sphi 0, %s249
      %s253 = sphi 0, %s252
      %s269 = sphi 0, %s253
      %s277 = sphi 0, %s279
      %s280 = sphi 0, %s277
      %s281 = sphi 0, %s280
      %s297 = sphi 0, %s281
      %s305 = sphi 0, %s307
      %s308 = sphi 0, %s305
      %s309 = sphi 0, %s308
      %s325 = sphi 0, %s309
    $region4: #{tpu_custom_call.1} parent=1 // loop_header_branch
      %32 = sbr.rel (%p30) target = $region8
    $region5: #{tpu_custom_call.1} parent=1 // loop_body
      %s34 = ssub.s32 %s29, 1
      %s35 = ssub.s32 %s29, 2
      %s42 = sadd.s32 1, %s37
      %p43 = scmp.ge.s32.totalorder %s42, 1
      %s44 = scalar_select %p43, 0, %s42
      %s45 = sadd.s32 1, %s36
      %s46 = scalar_select %p43, %s45, %s36
      %p47 = scmp.ge.s32.totalorder %s46, 2
      %s48 = scalar_select %p47, 0, %s46
      %s49 = ssub.s32 %s36, %s48
      %s50 = ssub.s32 %s37, %s44
      %s51 = sor.u32 %s49, %s50
      %p52 = scmp.eq.s32.totalorder %s51, 0
      %s54 = sadd.s32 %s53, 1
      %s55 = scalar_select %p52, %s53, %s54
      %p58 = pneg %p52
      %p59 = scmp.eq.s32.totalorder %s29, 1
      %p60 = por %p58, %p59
      %p61 = scmp.ne.s32.totalorder %s53, %s56
      %p62 = scmp.eq.s32.totalorder %s29, 0
      %p63 = por %p61, %p62
      %p64 = scmp.ne.s32.totalorder %s53, %s56
      %p65 = scmp.eq.s32.totalorder %s34, 1
      %p66 = por %p64, %p65
      %p67 = scmp.ne.s32.totalorder %s56, %s57
      %p68 = scmp.eq.s32.totalorder %s34, 0
      %p69 = por %p67, %p68
      %p70 = scmp.ne.s32.totalorder %s56, %s57
      %p71 = scmp.eq.s32.totalorder %s35, 1
      %p72 = por %p70, %p71
      %p74 = scmp.ne.s32.totalorder %s57, %s73
      %p75 = scmp.eq.s32.totalorder %s35, 0
      %p76 = por %p74, %p75
      %s78 = sadd.s32 %s77, 1
      %p81 = scmp.eq.s32.totalorder %s29, 1
      %p82 = scmp.ne.s32.totalorder %s77, %s79
      %p83 = scmp.eq.s32.totalorder %s29, 0
      %p84 = por %p82, %p83
      %p85 = scmp.ne.s32.totalorder %s77, %s79
      %p86 = scmp.eq.s32.totalorder %s34, 1
      %p87 = por %p85, %p86
      %p88 = scmp.ne.s32.totalorder %s79, %s80
      %p89 = scmp.eq.s32.totalorder %s34, 0
      %p90 = por %p88, %p89
      %p91 = scmp.ne.s32.totalorder %s79, %s80
      %p92 = scmp.eq.s32.totalorder %s35, 1
      %p93 = por %p91, %p92
      %p95 = scmp.ne.s32.totalorder %s80, %s94
      %p96 = scmp.eq.s32.totalorder %s35, 0
      %p97 = por %p95, %p96
      %s99 = sadd.s32 %s98, 1
      %p102 = scmp.eq.s32.totalorder %s29, 1
      %p103 = scmp.ne.s32.totalorder %s98, %s100
      %p104 = scmp.eq.s32.totalorder %s29, 0
      %p105 = por %p103, %p104
      %p106 = scmp.ne.s32.totalorder %s98, %s100
      %p107 = scmp.eq.s32.totalorder %s34, 1
      %p108 = por %p106, %p107
      %p109 = scmp.ne.s32.totalorder %s100, %s101
      %p110 = scmp.eq.s32.totalorder %s34, 0
      %p111 = por %p109, %p110
      %p112 = scmp.ne.s32.totalorder %s100, %s101
      %p113 = scmp.eq.s32.totalorder %s35, 1
      %p114 = por %p112, %p113
      %p116 = scmp.ne.s32.totalorder %s101, %s115
      %p117 = scmp.eq.s32.totalorder %s35, 0
      %p118 = por %p116, %p117
      %s120 = sadd.s32 %s119, 1
      %p123 = scmp.eq.s32.totalorder %s29, 1
      %p124 = scmp.ne.s32.totalorder %s119, %s121
      %p125 = scmp.eq.s32.totalorder %s29, 0
      %p126 = por %p124, %p125
      %p127 = scmp.ne.s32.totalorder %s119, %s121
      %p128 = scmp.eq.s32.totalorder %s34, 1
      %p129 = por %p127, %p128
      %p130 = scmp.ne.s32.totalorder %s121, %s122
      %p131 = scmp.eq.s32.totalorder %s34, 0
      %p132 = por %p130, %p131
      %p133 = scmp.ne.s32.totalorder %s121, %s122
      %p134 = scmp.eq.s32.totalorder %s35, 1
      %p135 = por %p133, %p134
      %p137 = scmp.ne.s32.totalorder %s122, %s136
      %p138 = scmp.eq.s32.totalorder %s35, 0
      %p139 = por %p137, %p138
      %s141 = sadd.s32 %s140, 1
      %p144 = scmp.eq.s32.totalorder %s29, 1
      %p145 = scmp.ne.s32.totalorder %s140, %s142
      %p146 = scmp.eq.s32.totalorder %s29, 0
      %p147 = por %p145, %p146
      %p148 = scmp.ne.s32.totalorder %s140, %s142
      %p149 = scmp.eq.s32.totalorder %s34, 1
      %p150 = por %p148, %p149
      %p151 = scmp.ne.s32.totalorder %s142, %s143
      %p152 = scmp.eq.s32.totalorder %s34, 0
      %p153 = por %p151, %p152
      %p154 = scmp.ne.s32.totalorder %s142, %s143
      %p155 = scmp.eq.s32.totalorder %s35, 1
      %p156 = por %p154, %p155
      %p158 = scmp.ne.s32.totalorder %s143, %s157
      %p159 = scmp.eq.s32.totalorder %s35, 0
      %p160 = por %p158, %p159
      %s162 = sadd.s32 %s161, 1
      %p165 = scmp.eq.s32.totalorder %s29, 1
      %p166 = scmp.ne.s32.totalorder %s161, %s163
      %p167 = scmp.eq.s32.totalorder %s29, 0
      %p168 = por %p166, %p167
      %p169 = scmp.ne.s32.totalorder %s161, %s163
      %p170 = scmp.eq.s32.totalorder %s34, 1
      %p171 = por %p169, %p170
      %p172 = scmp.ne.s32.totalorder %s163, %s164
      %p173 = scmp.eq.s32.totalorder %s34, 0
      %p174 = por %p172, %p173
      %p175 = scmp.ne.s32.totalorder %s163, %s164
      %p176 = scmp.eq.s32.totalorder %s35, 1
      %p177 = por %p175, %p176
      %p179 = scmp.ne.s32.totalorder %s164, %s178
      %p180 = scmp.eq.s32.totalorder %s35, 0
      %p181 = por %p179, %p180
      %s183 = sadd.s32 %s182, 1
      %p186 = scmp.eq.s32.totalorder %s29, 1
      %p187 = scmp.ne.s32.totalorder %s182, %s184
      %p188 = scmp.eq.s32.totalorder %s29, 0
      %p189 = por %p187, %p188
      %p190 = scmp.ne.s32.totalorder %s182, %s184
      %p191 = scmp.eq.s32.totalorder %s34, 1
      %p192 = por %p190, %p191
      %p193 = scmp.ne.s32.totalorder %s184, %s185
      %p194 = scmp.eq.s32.totalorder %s34, 0
      %p195 = por %p193, %p194
      %p196 = scmp.ne.s32.totalorder %s184, %s185
      %p197 = scmp.eq.s32.totalorder %s35, 1
      %p198 = por %p196, %p197
      %p200 = scmp.ne.s32.totalorder %s185, %s199
      %p201 = scmp.eq.s32.totalorder %s35, 0
      %p202 = por %p200, %p201
      %s204 = sadd.s32 %s203, 1
      %p207 = scmp.eq.s32.totalorder %s29, 1
      %p208 = scmp.ne.s32.totalorder %s203, %s205
      %p209 = scmp.eq.s32.totalorder %s29, 0
      %p210 = por %p208, %p209
      %p211 = scmp.ne.s32.totalorder %s203, %s205
      %p212 = scmp.eq.s32.totalorder %s34, 1
      %p213 = por %p211, %p212
      %p214 = scmp.ne.s32.totalorder %s205, %s206
      %p215 = scmp.eq.s32.totalorder %s34, 0
      %p216 = por %p214, %p215
      %p217 = scmp.ne.s32.totalorder %s205, %s206
      %p218 = scmp.eq.s32.totalorder %s35, 1
      %p219 = por %p217, %p218
      %p221 = scmp.ne.s32.totalorder %s206, %s220
      %p222 = scmp.eq.s32.totalorder %s35, 0
      %p223 = por %p221, %p222
      %s225 = sadd.s32 %s224, 1
      %p228 = scmp.eq.s32.totalorder %s29, 1
      %p229 = scmp.ne.s32.totalorder %s224, %s226
      %p230 = scmp.eq.s32.totalorder %s29, 0
      %p231 = por %p229, %p230
      %p232 = scmp.ne.s32.totalorder %s224, %s226
      %p233 = scmp.eq.s32.totalorder %s34, 1
      %p234 = por %p232, %p233
      %p235 = scmp.ne.s32.totalorder %s226, %s227
      %p236 = scmp.eq.s32.totalorder %s34, 0
      %p237 = por %p235, %p236
      %p238 = scmp.ne.s32.totalorder %s226, %s227
      %p239 = scmp.eq.s32.totalorder %s35, 1
      %p240 = por %p238, %p239
      %p242 = scmp.ne.s32.totalorder %s227, %s241
      %p243 = scmp.eq.s32.totalorder %s35, 0
      %p244 = por %p242, %p243
      %s245 = ssub.s32 %s36, %s48
      %s246 = ssub.s32 %s37, %s44
      %s247 = sor.u32 %s245, %s246
      %p248 = scmp.eq.s32.totalorder %s247, 0
      %s250 = sadd.s32 %s249, 1
      %s251 = scalar_select %p248, %s249, %s250
      %p254 = pneg %p248
      %p255 = scmp.eq.s32.totalorder %s29, 1
      %p256 = por %p254, %p255
      %p257 = scmp.ne.s32.totalorder %s249, %s252
      %p258 = scmp.eq.s32.totalorder %s29, 0
      %p259 = por %p257, %p258
      %p260 = scmp.ne.s32.totalorder %s249, %s252
      %p261 = scmp.eq.s32.totalorder %s34, 1
      %p262 = por %p260, %p261
      %p263 = scmp.ne.s32.totalorder %s252, %s253
      %p264 = scmp.eq.s32.totalorder %s34, 0
      %p265 = por %p263, %p264
      %p266 = scmp.ne.s32.totalorder %s252, %s253
      %p267 = scmp.eq.s32.totalorder %s35, 1
      %p268 = por %p266, %p267
      %p270 = scmp.ne.s32.totalorder %s253, %s269
      %p271 = scmp.eq.s32.totalorder %s35, 0
      %p272 = por %p270, %p271
      %s273 = ssub.s32 %s36, %s48
      %s274 = ssub.s32 %s37, %s44
      %s275 = sor.u32 %s273, %s274
      %p276 = scmp.eq.s32.totalorder %s275, 0
      %s278 = sadd.s32 %s277, 1
      %s279 = scalar_select %p276, %s277, %s278
      %p282 = pneg %p276
      %p283 = scmp.eq.s32.totalorder %s29, 1
      %p284 = por %p282, %p283
      %p285 = scmp.ne.s32.totalorder %s277, %s280
      %p286 = scmp.eq.s32.totalorder %s29, 0
      %p287 = por %p285, %p286
      %p288 = scmp.ne.s32.totalorder %s277, %s280
      %p289 = scmp.eq.s32.totalorder %s34, 1
      %p290 = por %p288, %p289
      %p291 = scmp.ne.s32.totalorder %s280, %s281
      %p292 = scmp.eq.s32.totalorder %s34, 0
      %p293 = por %p291, %p292
      %p294 = scmp.ne.s32.totalorder %s280, %s281
      %p295 = scmp.eq.s32.totalorder %s35, 1
      %p296 = por %p294, %p295
      %p298 = scmp.ne.s32.totalorder %s281, %s297
      %p299 = scmp.eq.s32.totalorder %s35, 0
      %p300 = por %p298, %p299
      %s301 = ssub.s32 %s36, %s48
      %s302 = ssub.s32 %s37, %s44
      %s303 = sor.u32 %s301, %s302
      %p304 = scmp.eq.s32.totalorder %s303, 0
      %s306 = sadd.s32 %s305, 1
      %s307 = scalar_select %p304, %s305, %s306
      %p310 = pneg %p304
      %p311 = scmp.eq.s32.totalorder %s29, 1
      %p312 = por %p310, %p311
      %p313 = scmp.ne.s32.totalorder %s305, %s308
      %p314 = scmp.eq.s32.totalorder %s29, 0
      %p315 = por %p313, %p314
      %p316 = scmp.ne.s32.totalorder %s305, %s308
      %p317 = scmp.eq.s32.totalorder %s34, 1
      %p318 = por %p316, %p317
      %p319 = scmp.ne.s32.totalorder %s308, %s309
      %p320 = scmp.eq.s32.totalorder %s34, 0
      %p321 = por %p319, %p320
      %p322 = scmp.ne.s32.totalorder %s308, %s309
      %p323 = scmp.eq.s32.totalorder %s35, 1
      %p324 = por %p322, %p323
      %p326 = scmp.ne.s32.totalorder %s309, %s325
      %p327 = scmp.eq.s32.totalorder %s35, 0
      %p328 = por %p326, %p327
      %p329 = scmp.le.s32.totalorder 1, %s29
      %p330 = scmp.lt.s32.totalorder %s29, 3
      %p331 = pnand %p329, %p330
      %p332 = pneg %p331
      // Predicated region
      $region9: #{tpu_custom_call.1} parent=5 // pred_check
        _
      $region10: #{tpu_custom_call.1} parent=5 // pred_check_branch
        %334 = sbr.rel (%p331) target = $region12
      $region11: #{tpu_custom_call.1} parent=5 // pred_region
        %s335 = ssub.s32 %s29, 1
        // Predicated region
        $region13: #{tpu_custom_call.1} parent=11 // pred_check
          %p336 = pneg %p90
        $region14: #{tpu_custom_call.1} parent=11 // pred_check_branch
          %338 = sbr.rel (%p336) target = $region16
        $region15: #{tpu_custom_call.1} parent=11 // pred_region
          _
        $region16: #{tpu_custom_call.1} parent=11 // pred_fallthru
          _
        // Predicated region
        $region17: #{tpu_custom_call.1} parent=11 // pred_check
          %p339 = pneg %p111
        $region18: #{tpu_custom_call.1} parent=11 // pred_check_branch
          %341 = sbr.rel (%p339) target = $region20
        $region19: #{tpu_custom_call.1} parent=11 // pred_region
          _
        $region20: #{tpu_custom_call.1} parent=11 // pred_fallthru
          _
        // Predicated region
        $region21: #{tpu_custom_call.1} parent=11 // pred_check
          %p342 = pneg %p132
        $region22: #{tpu_custom_call.1} parent=11 // pred_check_branch
          %344 = sbr.rel (%p342) target = $region24
        $region23: #{tpu_custom_call.1} parent=11 // pred_region
          %s346 = ssub.s32 512, 512
          %347 = vsyncadd [#allocation6], %s346
          %s348 = sshll.u32 [#allocation5], 4
          %s349 = int_to_ptr.vmem [resolvable:$true] %s348
          %354 = dma.hbm_to_vmem [thread:$0]  %s3, 512, %s349, [#allocation6], 128, 128, 8
        $region24: #{tpu_custom_call.1} parent=11 // pred_fallthru
          _
        // Predicated region
        $region25: #{tpu_custom_call.1} parent=11 // pred_check
          %p355 = pneg %p153
        $region26: #{tpu_custom_call.1} parent=11 // pred_check_branch
          %357 = sbr.rel (%p355) target = $region28
        $region27: #{tpu_custom_call.1} parent=11 // pred_region
          %s359 = ssub.s32 512, 512
          %360 = vsyncadd [#allocation6], %s359
          %s361 = sshll.u32 [#allocation7], 4
          %s362 = int_to_ptr.vmem [resolvable:$true] %s361
          %367 = dma.hbm_to_vmem [thread:$0]  %s4, 512, %s362, [#allocation6], 128, 128, 8
        $region28: #{tpu_custom_call.1} parent=11 // pred_fallthru
          _
        // Predicated region
        $region29: #{tpu_custom_call.1} parent=11 // pred_check
          %p368 = pneg %p174
        $region30: #{tpu_custom_call.1} parent=11 // pred_check_branch
          %370 = sbr.rel (%p368) target = $region32
        $region31: #{tpu_custom_call.1} parent=11 // pred_region
          %s372 = ssub.s32 512, 512
          %373 = vsyncadd [#allocation9], %s372
          %s374 = sshll.u32 [#allocation8], 4
          %s375 = int_to_ptr.vmem [resolvable:$true] %s374
          %380 = dma.hbm_to_vmem [thread:$0]  %s5, 512, %s375, [#allocation9], 128, 128, 8
        $region32: #{tpu_custom_call.1} parent=11 // pred_fallthru
          _
        // Predicated region
        $region33: #{tpu_custom_call.1} parent=11 // pred_check
          %p381 = pneg %p195
        $region34: #{tpu_custom_call.1} parent=11 // pred_check_branch
          %383 = sbr.rel (%p381) target = $region36
        $region35: #{tpu_custom_call.1} parent=11 // pred_region
          _
        $region36: #{tpu_custom_call.1} parent=11 // pred_fallthru
          _
        // Predicated region
        $region37: #{tpu_custom_call.1} parent=11 // pred_check
          %p384 = pneg %p216
        $region38: #{tpu_custom_call.1} parent=11 // pred_check_branch
          %386 = sbr.rel (%p384) target = $region40
        $region39: #{tpu_custom_call.1} parent=11 // pred_region
          _
        $region40: #{tpu_custom_call.1} parent=11 // pred_fallthru
          _
        // Predicated region
        $region41: #{tpu_custom_call.1} parent=11 // pred_check
          %p387 = pneg %p237
        $region42: #{tpu_custom_call.1} parent=11 // pred_check_branch
          %389 = sbr.rel (%p387) target = $region44
        $region43: #{tpu_custom_call.1} parent=11 // pred_region
          _
        $region44: #{tpu_custom_call.1} parent=11 // pred_fallthru
          _
      $region12: #{tpu_custom_call.1} parent=5 // pred_fallthru
        _
      %p390 = scmp.lt.s32.totalorder %s29, 2
      // Predicated region
      $region45: #{tpu_custom_call.1} parent=5 // pred_check
        %p391 = pneg %p390
      $region46: #{tpu_custom_call.1} parent=5 // pred_check_branch
        %393 = sbr.rel (%p391) target = $region48
      $region47: #{tpu_custom_call.1} parent=5 // pred_region
        // Predicated region
        $region49: #{tpu_custom_call.1} parent=47 // pred_check
          %p394 = pneg %p63
        $region50: #{tpu_custom_call.1} parent=47 // pred_check_branch
          %396 = sbr.rel (%p394) target = $region52
        $region51: #{tpu_custom_call.1} parent=47 // pred_region
          %s397 = sand.u32 %s53, 1
          %s398 = scalar_lea.sflag [#allocation3], %s397
          %s399 = sand.u32 %s53, 1
          %s400 = smul.addr %s399, 8
          %s401 = scalar_lea.vmem [#allocation2], %s400
          %s403 = ssub.s32 128, 128
          %404 = vsyncadd %s398, %s403
          %s405 = sadd.s32 %s37, %s36
          %s406 = smul.addr %s405, 128
          %s407 = scalar_lea.hbm %s0, %s406
          %s409 = sshll.u32 %s401, 4
          %s410 = int_to_ptr.vmem [resolvable:$true] %s409
          %412 = dma.hbm_to_vmem [thread:$0]  %s407, 128, %s410, %s398
        $region52: #{tpu_custom_call.1} parent=47 // pred_fallthru
          _
      $region48: #{tpu_custom_call.1} parent=5 // pred_fallthru
        _
      %p413 = scmp.le.s32.totalorder 1, %s29
      %p414 = scmp.lt.s32.totalorder %s29, 3
      %p415 = pnand %p413, %p414
      %p416 = pneg %p415
      // Predicated region
      $region53: #{tpu_custom_call.1} parent=5 // pred_check
        _
      $region54: #{tpu_custom_call.1} parent=5 // pred_check_branch
        %418 = sbr.rel (%p415) target = $region56
      $region55: #{tpu_custom_call.1} parent=5 // pred_region
        %s419 = ssub.s32 %s29, 1
        %s420 = sand.u32 %s56, 1
        %s421 = scalar_lea.sflag [#allocation3], %s420
        %s422 = sand.u32 %s56, 1
        %s423 = smul.addr %s422, 8
        %s424 = scalar_lea.vmem [#allocation2], %s423
        // Predicated region
        $region57: #{tpu_custom_call.1} parent=55 // pred_check
          %p425 = pneg %p69
        $region58: #{tpu_custom_call.1} parent=55 // pred_check_branch
          %427 = sbr.rel (%p425) target = $region60
        $region59: #{tpu_custom_call.1} parent=55 // pred_region
          %428 = dma.done %s421, 128
        $region60: #{tpu_custom_call.1} parent=55 // pred_fallthru
          _
        // Predicated region
        $region61: #{tpu_custom_call.1} parent=55 // pred_check
          %p429 = pneg %p132
        $region62: #{tpu_custom_call.1} parent=55 // pred_check_branch
          %431 = sbr.rel (%p429) target = $region64
        $region63: #{tpu_custom_call.1} parent=55 // pred_region
          %432 = dma.done [#allocation6], 512
        $region64: #{tpu_custom_call.1} parent=55 // pred_fallthru
          _
        // Predicated region
        $region65: #{tpu_custom_call.1} parent=55 // pred_check
          %p433 = pneg %p153
        $region66: #{tpu_custom_call.1} parent=55 // pred_check_branch
          %435 = sbr.rel (%p433) target = $region68
        $region67: #{tpu_custom_call.1} parent=55 // pred_region
          %436 = dma.done [#allocation6], 512
        $region68: #{tpu_custom_call.1} parent=55 // pred_fallthru
          _
        // Predicated region
        $region69: #{tpu_custom_call.1} parent=55 // pred_check
          %p437 = pneg %p174
        $region70: #{tpu_custom_call.1} parent=55 // pred_check_branch
          %439 = sbr.rel (%p437) target = $region72
        $region71: #{tpu_custom_call.1} parent=55 // pred_region
          %440 = dma.done [#allocation9], 512
        $region72: #{tpu_custom_call.1} parent=55 // pred_fallthru
          _
        %s441 = sand.u32 %s56, 1
        %s442 = scalar_lea.sflag [#allocation3], %s441
        %s443 = sand.u32 %s56, 1
        %s444 = smul.addr %s443, 8
        %s445 = scalar_lea.vmem [#allocation2], %s444
        %p446 = pneg %p69
        %p447 = pneg %p66
        %p448 = pneg %p90
        %p449 = pneg %p87
        %p450 = pneg %p111
        %p451 = pneg %p108
        %p452 = pneg %p132
        %p453 = pneg %p129
        %p454 = pneg %p153
        %p455 = pneg %p150
        %p456 = pneg %p174
        %p457 = pneg %p171
        %p458 = pneg %p195
        %p459 = pneg %p192
        %p460 = pneg %p216
        %p461 = pneg %p213
        %p462 = pneg %p237
        %p463 = pneg %p234
        %p464 = pneg %p265
        %p465 = pneg %p262
        %s466 = sand.u32 %s252, 1
        %s467 = scalar_lea.sflag [#allocation4], %s466
        %s468 = sand.u32 %s252, 1
        %s469 = smul.addr %s468, 8
        %s470 = scalar_lea.vmem [#allocation10], %s469
        %p471 = pneg %p293
        %p472 = pneg %p290
        %s473 = sand.u32 %s34, 1
        %s474 = scalar_lea.sflag [#allocation12], %s473
        %s475 = sand.u32 %s280, 1
        %s476 = smul.addr %s475, 8
        %s477 = scalar_lea.vmem [#allocation11], %s476
        %p478 = pneg %p321
        %p479 = pneg %p318
        %s480 = sand.u32 %s34, 1
        %s481 = scalar_lea.sflag [#allocation12], %s480
        %s482 = sand.u32 %s308, 1
        %s483 = smul.addr %s482, 8
        %s484 = scalar_lea.vmem [#allocation13], %s483
        %v485 = vld [vmem:[%s424] sm:$0xff]
        %v486 = vld [vmem:[%s1] sm:$0x1]
        %v487 = vld [vmem:[%s2] sm:$0x1]
        %vm488 = vcmask 261120
        %v489 = vsel %vm488, %v485, 0.0
        %490 = vadd.xlane.f32.xlu0 %v489
        %v491 = vpop.xlane.xlu0 %490
        %v492 = vrcp.pop 32.0
        %v493 = vmul.f32 %v491, %v492
        %v494 = vsub.f32 %v485, %v493
        %v495 = vmul.f32 %v494, %v494
        %v496 = vsel %vm488, %v495, 0.0
        %497 = vadd.xlane.f32.xlu0 %v496
        %v498 = vpop.xlane.xlu0 %497
        %v499 = vmul.f32 %v498, %v492
        %v500 = vadd.f32 %v499, 1e-05
        %v501 = vrsqrt.pop %v500
        %v502 = vmul.f32 %v494, %v501
        %v504 = vlaneseq
        %v505 = vshrl.u32 %v504, 7
        %v506 = vsub.s32 0, %v505
        %v507 = vrot.slane %v486, %v506
        %v509 = vmul.f32 %v502, %v507
        %v511 = vlaneseq
        %v512 = vshrl.u32 %v511, 7
        %v513 = vsub.s32 0, %v512
        %v514 = vrot.slane %v487, %v513
        %v516 = vadd.f32 %v509, %v514
        %v517 = vld [vmem:[#allocation5] sm:$0xff]
        %v518 = vld [vmem:[#allocation5 + $0x8] sm:$0xff]
        %v519 = vld [vmem:[#allocation5 + $0x10] sm:$0xff]
        %v520 = vld [vmem:[#allocation5 + $0x18] sm:$0xff]
        %v521 = vld [vmem:[%s6] sm:$0x1]
        %v523 = vlaneseq
        %v524 = vshrl.u32 %v523, 7
        %v525 = vsub.s32 0, %v524
        %v526 = vrot.slane %v521, %v525
        %v529 = vsel %vm488, %v516, 0
        %531 = vmatprep.subr.mxu0 0.0
        %532 = vmatpush1.msra.mxu0 %v517
        %533 = vmatprep.subr.mxu0 0.0
        %534 = vmatpush1.msra.mxu0 %v518
        %535 = vmatprep.subr.mxu0 0.0
        %536 = vmatpush1.msra.mxu0 %v519
        %537 = vmatprep.subr.mxu0 0.0
        %538 = vmatpush1.msra.mxu0 %v520
        %539 = vmatprep.subr.mxu0 0.0
        %540 = vmatpush1.msra.mxu0 0.0
        %541 = vmatprep.subr.mxu0 0.0
        %542 = vmatpush1.msra.mxu0 0.0
        %543 = vmatprep.subr.mxu0 0.0
        %544 = vmatpush1.msra.mxu0 0.0
        %545 = vmatprep.subr.mxu0 0.0
        %546 = vmatpush1.msra.mxu0 0.0
        %547 = vmatprep.subr.mxu0 0.0
        %548 = vmatpush1.msra.mxu0 0.0
        %549 = vmatprep.subr.mxu0 0.0
        %550 = vmatpush1.msra.mxu0 0.0
        %551 = vmatprep.subr.mxu0 0.0
        %552 = vmatpush1.msra.mxu0 0.0
        %553 = vmatprep.subr.mxu0 0.0
        %554 = vmatpush1.msra.mxu0 0.0
        %555 = vmatprep.subr.mxu0 0.0
        %556 = vmatpush1.msra.mxu0 0.0
        %557 = vmatprep.subr.mxu0 0.0
        %558 = vmatpush1.msra.mxu0 0.0
        %559 = vmatprep.subr.mxu0 0.0
        %560 = vmatpush1.msra.mxu0 0.0
        %561 = vmatprep.subr.mxu0 0.0
        %562 = vmatpush1.msra.mxu0 0.0
        %563 = vmatprep.subr.mxu0 0.0
        %564 = vmatpush1.msra.mxu0 0.0
        %565 = vmatprep.subr.mxu0 0.0
        %566 = vmatpush1.msra.mxu0 0.0
        %567 = vmatprep.subr.mxu0 0.0
        %568 = vmatpush1.msra.mxu0 0.0
        %569 = vmatprep.subr.mxu0 0.0
        %570 = vmatpush1.msra.mxu0 0.0
        %571 = vmatprep.subr.mxu0 0.0
        %572 = vmatpush1.msra.mxu0 0.0
        %573 = vmatprep.subr.mxu0 0.0
        %574 = vmatpush1.msra.mxu0 0.0
        %575 = vmatprep.subr.mxu0 0.0
        %576 = vmatpush1.msra.mxu0 0.0
        %577 = vmatprep.subr.mxu0 0.0
        %578 = vmatpush1.msra.mxu0 0.0
        %579 = vmatprep.subr.mxu0 0.0
        %580 = vmatpush1.msra.mxu0 0.0
        %581 = vmatprep.subr.mxu0 0.0
        %582 = vmatpush1.msra.mxu0 0.0
        %583 = vmatprep.subr.mxu0 0.0
        %584 = vmatpush1.msra.mxu0 0.0
        %585 = vmatprep.subr.mxu0 0.0
        %586 = vmatpush1.msra.mxu0 0.0
        %587 = vmatprep.subr.mxu0 0.0
        %588 = vmatpush1.msra.mxu0 0.0
        %589 = vmatprep.subr.mxu0 0.0
        %590 = vmatpush1.msra.mxu0 0.0
        %591 = vmatprep.subr.mxu0 0.0
        %592 = vmatpush1.msra.mxu0 0.0
        %593 = vmatprep.subr.mxu0 0.0
        %594 = vmatpush1.msra.mxu0 0.0
        %595 = vmatprep.mubr.f32.mxu0 0.0
        %596 = vmatmul.mubr.f32.gmra.mrb[0].mxu0 %v529
        %v597 = vpop.f32.mrb[0].mxu0
        %v598 = vadd.f32 %v526, %v597
        %v599 = vpop.f32.mrb[0].mxu0
        %600 = vdwg.mxu0
        %v601 = vld [vmem:[#allocation7] sm:$0xff]
        %v602 = vld [vmem:[#allocation7 + $0x8] sm:$0xff]
        %v603 = vld [vmem:[#allocation7 + $0x10] sm:$0xff]
        %v604 = vld [vmem:[#allocation7 + $0x18] sm:$0xff]
        %v605 = vld [vmem:[%s7] sm:$0x1]
        %v607 = vlaneseq
        %v608 = vshrl.u32 %v607, 7
        %v609 = vsub.s32 0, %v608
        %v610 = vrot.slane %v605, %v609
        %612 = vmatprep.subr.mxu0 0.0
        %613 = vmatpush1.msra.mxu0 %v601
        %614 = vmatprep.subr.mxu0 0.0
        %615 = vmatpush1.msra.mxu0 %v602
        %616 = vmatprep.subr.mxu0 0.0
        %617 = vmatpush1.msra.mxu0 %v603
        %618 = vmatprep.subr.mxu0 0.0
        %619 = vmatpush1.msra.mxu0 %v604
        %620 = vmatprep.subr.mxu0 0.0
        %621 = vmatpush1.msra.mxu0 0.0
        %622 = vmatprep.subr.mxu0 0.0
        %623 = vmatpush1.msra.mxu0 0.0
        %624 = vmatprep.subr.mxu0 0.0
        %625 = vmatpush1.msra.mxu0 0.0
        %626 = vmatprep.subr.mxu0 0.0
        %627 = vmatpush1.msra.mxu0 0.0
        %628 = vmatprep.subr.mxu0 0.0
        %629 = vmatpush1.msra.mxu0 0.0
        %630 = vmatprep.subr.mxu0 0.0
        %631 = vmatpush1.msra.mxu0 0.0
        %632 = vmatprep.subr.mxu0 0.0
        %633 = vmatpush1.msra.mxu0 0.0
        %634 = vmatprep.subr.mxu0 0.0
        %635 = vmatpush1.msra.mxu0 0.0
        %636 = vmatprep.subr.mxu0 0.0
        %637 = vmatpush1.msra.mxu0 0.0
        %638 = vmatprep.subr.mxu0 0.0
        %639 = vmatpush1.msra.mxu0 0.0
        %640 = vmatprep.subr.mxu0 0.0
        %641 = vmatpush1.msra.mxu0 0.0
        %642 = vmatprep.subr.mxu0 0.0
        %643 = vmatpush1.msra.mxu0 0.0
        %644 = vmatprep.subr.mxu0 0.0
        %645 = vmatpush1.msra.mxu0 0.0
        %646 = vmatprep.subr.mxu0 0.0
        %647 = vmatpush1.msra.mxu0 0.0
        %648 = vmatprep.subr.mxu0 0.0
        %649 = vmatpush1.msra.mxu0 0.0
        %650 = vmatprep.subr.mxu0 0.0
        %651 = vmatpush1.msra.mxu0 0.0
        %652 = vmatprep.subr.mxu0 0.0
        %653 = vmatpush1.msra.mxu0 0.0
        %654 = vmatprep.subr.mxu0 0.0
        %655 = vmatpush1.msra.mxu0 0.0
        %656 = vmatprep.subr.mxu0 0.0
        %657 = vmatpush1.msra.mxu0 0.0
        %658 = vmatprep.subr.mxu0 0.0
        %659 = vmatpush1.msra.mxu0 0.0
        %660 = vmatprep.subr.mxu0 0.0
        %661 = vmatpush1.msra.mxu0 0.0
        %662 = vmatprep.subr.mxu0 0.0
        %663 = vmatpush1.msra.mxu0 0.0
        %664 = vmatprep.subr.mxu0 0.0
        %665 = vmatpush1.msra.mxu0 0.0
        %666 = vmatprep.subr.mxu0 0.0
        %667 = vmatpush1.msra.mxu0 0.0
        %668 = vmatprep.subr.mxu0 0.0
        %669 = vmatpush1.msra.mxu0 0.0
        %670 = vmatprep.subr.mxu0 0.0
        %671 = vmatpush1.msra.mxu0 0.0
        %672 = vmatprep.subr.mxu0 0.0
        %673 = vmatpush1.msra.mxu0 0.0
        %674 = vmatprep.subr.mxu0 0.0
        %675 = vmatpush1.msra.mxu0 0.0
        %676 = vmatprep.mubr.f32.mxu0 0.0
        %677 = vmatmul.mubr.f32.gmra.mrb[0].mxu0 %v529
        %v678 = vpop.f32.mrb[0].mxu0
        %v679 = vadd.f32 %v610, %v678
        %v680 = vpop.f32.mrb[0].mxu0
        %681 = vdwg.mxu0
        %v682 = vld [vmem:[#allocation8] sm:$0xff]
        %v683 = vld [vmem:[#allocation8 + $0x8] sm:$0xff]
        %v684 = vld [vmem:[#allocation8 + $0x10] sm:$0xff]
        %v685 = vld [vmem:[#allocation8 + $0x18] sm:$0xff]
        %v686 = vld [vmem:[%s8] sm:$0x1]
        %v688 = vlaneseq
        %v689 = vshrl.u32 %v688, 7
        %v690 = vsub.s32 0, %v689
        %v691 = vrot.slane %v686, %v690
        %693 = vmatprep.subr.mxu0 0.0
        %694 = vmatpush1.msra.mxu0 %v682
        %695 = vmatprep.subr.mxu0 0.0
        %696 = vmatpush1.msra.mxu0 %v683
        %697 = vmatprep.subr.mxu0 0.0
        %698 = vmatpush1.msra.mxu0 %v684
        %699 = vmatprep.subr.mxu0 0.0
        %700 = vmatpush1.msra.mxu0 %v685
        %701 = vmatprep.subr.mxu0 0.0
        %702 = vmatpush1.msra.mxu0 0.0
        %703 = vmatprep.subr.mxu0 0.0
        %704 = vmatpush1.msra.mxu0 0.0
        %705 = vmatprep.subr.mxu0 0.0
        %706 = vmatpush1.msra.mxu0 0.0
        %707 = vmatprep.subr.mxu0 0.0
        %708 = vmatpush1.msra.mxu0 0.0
        %709 = vmatprep.subr.mxu0 0.0
        %710 = vmatpush1.msra.mxu0 0.0
        %711 = vmatprep.subr.mxu0 0.0
        %712 = vmatpush1.msra.mxu0 0.0
        %713 = vmatprep.subr.mxu0 0.0
        %714 = vmatpush1.msra.mxu0 0.0
        %715 = vmatprep.subr.mxu0 0.0
        %716 = vmatpush1.msra.mxu0 0.0
        %717 = vmatprep.subr.mxu0 0.0
        %718 = vmatpush1.msra.mxu0 0.0
        %719 = vmatprep.subr.mxu0 0.0
        %720 = vmatpush1.msra.mxu0 0.0
        %721 = vmatprep.subr.mxu0 0.0
        %722 = vmatpush1.msra.mxu0 0.0
        %723 = vmatprep.subr.mxu0 0.0
        %724 = vmatpush1.msra.mxu0 0.0
        %725 = vmatprep.subr.mxu0 0.0
        %726 = vmatpush1.msra.mxu0 0.0
        %727 = vmatprep.subr.mxu0 0.0
        %728 = vmatpush1.msra.mxu0 0.0
        %729 = vmatprep.subr.mxu0 0.0
        %730 = vmatpush1.msra.mxu0 0.0
        %731 = vmatprep.subr.mxu0 0.0
        %732 = vmatpush1.msra.mxu0 0.0
        %733 = vmatprep.subr.mxu0 0.0
        %734 = vmatpush1.msra.mxu0 0.0
        %735 = vmatprep.subr.mxu0 0.0
        %736 = vmatpush1.msra.mxu0 0.0
        %737 = vmatprep.subr.mxu0 0.0
        %738 = vmatpush1.msra.mxu0 0.0
        %739 = vmatprep.subr.mxu0 0.0
        %740 = vmatpush1.msra.mxu0 0.0
        %741 = vmatprep.subr.mxu0 0.0
        %742 = vmatpush1.msra.mxu0 0.0
        %743 = vmatprep.subr.mxu0 0.0
        %744 = vmatpush1.msra.mxu0 0.0
        %745 = vmatprep.subr.mxu0 0.0
        %746 = vmatpush1.msra.mxu0 0.0
        %747 = vmatprep.subr.mxu0 0.0
        %748 = vmatpush1.msra.mxu0 0.0
        %749 = vmatprep.subr.mxu0 0.0
        %750 = vmatpush1.msra.mxu0 0.0
        %751 = vmatprep.subr.mxu0 0.0
        %752 = vmatpush1.msra.mxu0 0.0
        %753 = vmatprep.subr.mxu0 0.0
        %754 = vmatpush1.msra.mxu0 0.0
        %755 = vmatprep.subr.mxu0 0.0
        %756 = vmatpush1.msra.mxu0 0.0
        %757 = vmatprep.mubr.f32.mxu0 0.0
        %758 = vmatmul.mubr.f32.gmra.mrb[0].mxu0 %v529
        %v759 = vpop.f32.mrb[0].mxu0
        %v760 = vadd.f32 %v691, %v759
        %v761 = vpop.f32.mrb[0].mxu0
        %762 = vdwg.mxu0
        %763 = vst.msk [vmem:[%s470] sm:$0xff] %vm488, %v598
        %764 = vst.msk [vmem:[%s477] sm:$0xff] %vm488, %v679
        %765 = vst.msk [vmem:[%s484] sm:$0xff] %vm488, %v760
        %s766 = sand.u32 %s252, 1
        %s767 = scalar_lea.sflag [#allocation4], %s766
        %s768 = sand.u32 %s252, 1
        %s769 = smul.addr %s768, 8
        %s770 = scalar_lea.vmem [#allocation10], %s769
        %s771 = sand.u32 %s34, 1
        %s772 = scalar_lea.sflag [#allocation12], %s771
        %s773 = sand.u32 %s280, 1
        %s774 = smul.addr %s773, 8
        %s775 = scalar_lea.vmem [#allocation11], %s774
        %s776 = sand.u32 %s34, 1
        %s777 = scalar_lea.sflag [#allocation12], %s776
        %s778 = sand.u32 %s308, 1
        %s779 = smul.addr %s778, 8
        %s780 = scalar_lea.vmem [#allocation13], %s779
        // Predicated region
        $region73: #{tpu_custom_call.1} parent=55 // pred_check
          %p781 = pneg %p262
        $region74: #{tpu_custom_call.1} parent=55 // pred_check_branch
          %783 = sbr.rel (%p781) target = $region76
        $region75: #{tpu_custom_call.1} parent=55 // pred_region
          %s785 = ssub.s32 128, 128
          %786 = vsyncadd %s767, %s785
          %s787 = sadd.s32 %s39, %s38
          %s788 = smul.addr %s787, 128
          %s789 = scalar_lea.hbm %s9, %s788
          %s791 = sshll.u32 %s770, 4
          %s792 = int_to_ptr.vmem [resolvable:$true] %s791
          %794 = dma.vmem_to_hbm [thread:$0]  %s792, 128, %s789, %s767
        $region76: #{tpu_custom_call.1} parent=55 // pred_fallthru
          _
        // Predicated region
        $region77: #{tpu_custom_call.1} parent=55 // pred_check
          %p795 = pneg %p290
        $region78: #{tpu_custom_call.1} parent=55 // pred_check_branch
          %797 = sbr.rel (%p795) target = $region80
        $region79: #{tpu_custom_call.1} parent=55 // pred_region
          %s799 = ssub.s32 128, 128
          %800 = vsyncadd %s772, %s799
          %s801 = sadd.s32 %s39, %s38
          %s802 = smul.addr %s801, 128
          %s803 = scalar_lea.hbm %s10, %s802
          %s805 = sshll.u32 %s775, 4
          %s806 = int_to_ptr.vmem [resolvable:$true] %s805
          %808 = dma.vmem_to_hbm [thread:$0]  %s806, 128, %s803, %s772
        $region80: #{tpu_custom_call.1} parent=55 // pred_fallthru
          _
        // Predicated region
        $region81: #{tpu_custom_call.1} parent=55 // pred_check
          %p809 = pneg %p318
        $region82: #{tpu_custom_call.1} parent=55 // pred_check_branch
          %811 = sbr.rel (%p809) target = $region84
        $region83: #{tpu_custom_call.1} parent=55 // pred_region
          %s813 = ssub.s32 128, 128
          %814 = vsyncadd %s777, %s813
          %s815 = sadd.s32 %s39, %s38
          %s816 = smul.addr %s815, 128
          %s817 = scalar_lea.hbm %s11, %s816
          %s819 = sshll.u32 %s780, 4
          %s820 = int_to_ptr.vmem [resolvable:$true] %s819
          %822 = dma.vmem_to_hbm [thread:$0]  %s820, 128, %s817, %s777
        $region84: #{tpu_custom_call.1} parent=55 // pred_fallthru
          _
      $region56: #{tpu_custom_call.1} parent=5 // pred_fallthru
        _
      %p823 = scmp.le.s32.totalorder 2, %s29
      // Predicated region
      $region85: #{tpu_custom_call.1} parent=5 // pred_check
        %p824 = pneg %p823
      $region86: #{tpu_custom_call.1} parent=5 // pred_check_branch
        %826 = sbr.rel (%p824) target = $region88
      $region87: #{tpu_custom_call.1} parent=5 // pred_region
        %s827 = ssub.s32 %s29, 2
        // Predicated region
        $region89: #{tpu_custom_call.1} parent=87 // pred_check
          %p828 = pneg %p268
        $region90: #{tpu_custom_call.1} parent=87 // pred_check_branch
          %830 = sbr.rel (%p828) target = $region92
        $region91: #{tpu_custom_call.1} parent=87 // pred_region
          %s831 = sand.u32 %s253, 1
          %s832 = scalar_lea.sflag [#allocation4], %s831
          %s833 = sand.u32 %s253, 1
          %s834 = smul.addr %s833, 8
          %s835 = scalar_lea.vmem [#allocation10], %s834
          %836 = dma.done %s832, 128
        $region92: #{tpu_custom_call.1} parent=87 // pred_fallthru
          _
        // Predicated region
        $region93: #{tpu_custom_call.1} parent=87 // pred_check
          %p837 = pneg %p296
        $region94: #{tpu_custom_call.1} parent=87 // pred_check_branch
          %839 = sbr.rel (%p837) target = $region96
        $region95: #{tpu_custom_call.1} parent=87 // pred_region
          %s840 = sand.u32 %s35, 1
          %s841 = scalar_lea.sflag [#allocation12], %s840
          %s842 = sand.u32 %s281, 1
          %s843 = smul.addr %s842, 8
          %s844 = scalar_lea.vmem [#allocation11], %s843
          %845 = dma.done %s841, 128
        $region96: #{tpu_custom_call.1} parent=87 // pred_fallthru
          _
        // Predicated region
        $region97: #{tpu_custom_call.1} parent=87 // pred_check
          %p846 = pneg %p324
        $region98: #{tpu_custom_call.1} parent=87 // pred_check_branch
          %848 = sbr.rel (%p846) target = $region100
        $region99: #{tpu_custom_call.1} parent=87 // pred_region
          %s849 = sand.u32 %s35, 1
          %s850 = scalar_lea.sflag [#allocation12], %s849
          %s851 = sand.u32 %s309, 1
          %s852 = smul.addr %s851, 8
          %s853 = scalar_lea.vmem [#allocation13], %s852
          %854 = dma.done %s850, 128
        $region100: #{tpu_custom_call.1} parent=87 // pred_fallthru
          _
      $region88: #{tpu_custom_call.1} parent=5 // pred_fallthru
        _
    $region6: #{tpu_custom_call.1} parent=1 // loop_footer
      %s33 = sadd.s32 1, %s29
    $region7: #{tpu_custom_call.1} parent=1 // loop_footer_branch
      %28 = sbr.rel target = $region3
    $region8: #{tpu_custom_call.1} parent=1 // loop_exit
      _
    %855 = vsyncpa [#allocation3], 1
    %s856 = scalar_lea.sflag [#allocation3], 1
    %857 = vsyncpa %s856, 1
    %858 = vsyncpa [#allocation6], 1
    %859 = vsyncpa [#allocation9], 1
    %860 = vsyncpa [#allocation4], 1
    %s861 = scalar_lea.sflag [#allocation4], 1
    %862 = vsyncpa %s861, 1
    %863 = vsyncpa [#allocation12], 1
    %s864 = scalar_lea.sflag [#allocation12], 1
    %865 = vsyncpa %s864, 1

</llo_original>
